<compile_context>
chip_gen: v7x
topology: tpu7x:2x2x1
jax: 0.10.0
libtpu: 0.0.40
codegen_flags: <defaults>
</compile_context>

<pallas_src>
import jax
import jax.numpy as jnp
from jax import lax
from jax.experimental import pallas as pl
from jax.experimental.pallas import tpu as pltpu

NEG_SLOPE = 0.01  # nn.LeakyReLU default negative_slope


# ------------------------------ fused kernel ------------------------------

def _make_kernel(TRo, Wo, Cin, Cout, S, cdt):
    """Fused conv1+LeakyReLU+conv2+GDN+skip for a strip of TRo output rows."""
    P = TRo + 2            # conv1 rows produced per strip (incl. conv2 halo rows)
    KI = 9 * Cin           # folded K for conv1
    KO = 9 * Cout          # folded K for conv2

    def kernel(xee, xeo, xoe, xoo,                       # per-image parity blocks
               w1, b1, w2, b2, gma, beta, wsk, bsk,      # weights
               o_ref):                                   # (TRo*Wo, Cout) output
        r = pl.program_id(1)
        h0 = pl.multiple_of(TRo * r, TRo)

        # ---- slice this strip's halo window out of the resident image blocks ----
        ee = xee[pl.ds(h0, P + 1), :, :]   # even rows, even cols  (P+1, Wo+1, Cin)
        eo = xeo[pl.ds(h0, P + 1), :, :]   # even rows, odd  cols
        oe = xoe[pl.ds(h0, P), :, :]       # odd  rows, even cols  (P,   Wo+1, Cin)
        oo = xoo[pl.ds(h0, P), :, :]       # odd  rows, odd  cols

        ee0, ee2 = ee[:, 0:Wo, :], ee[:, 1:Wo + 1, :]
        eo0 = eo[:, 0:Wo, :]
        oe0, oe2 = oe[:, 0:Wo, :], oe[:, 1:Wo + 1, :]
        oo0 = oo[:, 0:Wo, :]

        # ---- conv1 (3x3, stride 2, pad 1): 9 taps folded -> one K=9*Cin matmul ----
        taps1 = [ee0[0:P],     eo0[0:P],     ee2[0:P],        # ki = 0
                 oe0,          oo0,          oe2,             # ki = 1
                 ee0[1:P + 1], eo0[1:P + 1], ee2[1:P + 1]]    # ki = 2
        a1 = jnp.concatenate(taps1, axis=-1).reshape(P * Wo, KI)
        z1 = jnp.dot(a1, w1[...], preferred_element_type=jnp.float32) + b1[...]
        z1 = jnp.where(z1 >= 0, z1, NEG_SLOPE * z1)           # LeakyReLU (f32)

        # ---- zero conv2's top/bottom zero-pad rows (boundary strips only) --------
        ridx = lax.broadcasted_iota(jnp.int32, (P * Wo, Cout), 0)
        pad_row = ((r == 0) & (ridx < Wo)) | ((r == S - 1) & (ridx >= (P - 1) * Wo))
        z1 = jnp.where(pad_row, 0.0, z1)

        z1c = z1.reshape(P, Wo, Cout).astype(cdt)

        # ---- conv2 (3x3, stride 1, pad 1): +-1 column shifts as values, all 9 taps
        #      folded -> one K=9*Cout matmul (no scratch ref, no offset staging) ----
        zcol = jnp.zeros((P, 1, Cout), cdt)
        zl = jnp.concatenate([zcol, z1c[:, 0:Wo - 1, :]], axis=1)   # column w-1
        zr = jnp.concatenate([z1c[:, 1:Wo, :], zcol], axis=1)       # column w+1
        taps2 = [zl[0:TRo],     z1c[0:TRo],     zr[0:TRo],
                 zl[1:TRo + 1], z1c[1:TRo + 1], zr[1:TRo + 1],
                 zl[2:TRo + 2], z1c[2:TRo + 2], zr[2:TRo + 2]]
        a2 = jnp.concatenate(taps2, axis=-1).reshape(TRo * Wo, KO)
        z2 = jnp.dot(a2, w2[...], preferred_element_type=jnp.float32) + b2[...]

        # ---- GDN fully in f32: z * rsqrt(z^2 @ gamma + beta) ---------------------
        norm = jnp.dot(z2 * z2, gma[...],
                       preferred_element_type=jnp.float32) + beta[...]
        y = z2 * lax.rsqrt(norm)

        # ---- 1x1 stride-2 skip conv + residual add -------------------------------
        xs = oo0[1:TRo + 1]                                    # x at (2h, 2w)
        sk = jnp.dot(xs.reshape(TRo * Wo, Cin), wsk[...],
                     preferred_element_type=jnp.float32) + bsk[...]
        o_ref[...] = (y + sk).astype(o_ref.dtype)

    return kernel


# ------------------------------ host-side prep ------------------------------

def _prep_inputs(x_nhwc, compute_dtype):
    """One cheap fused pass: cast + pad + row/col parity split (NO per-strip restripe).

    Parity split makes every 3x3/stride-2 tap a contiguous slice inside the kernel.
    Rows are padded (3, 2) so the conv2 halo rows above/below the image can be
    computed from zeros and then masked, without out-of-range reads.
    """
    xp = jnp.pad(x_nhwc.astype(compute_dtype), ((0, 0), (3, 2), (1, 1), (0, 0)))
    xe_c, xo_c = xp[:, :, 0::2, :], xp[:, :, 1::2, :]          # padded-col parity
    return (xe_c[:, 0::2], xo_c[:, 0::2],                      # even padded rows
            xe_c[:, 1::2], xo_c[:, 1::2])                      # odd  padded rows


def _pick_row_tile(Ho, cap=32):
    """Largest divisor of Ho <= cap; awkward (e.g. prime) Ho -> one strip, never 1."""
    t = max(d for d in range(1, min(Ho, cap) + 1) if Ho % d == 0)
    if t < min(8, Ho):
        t = Ho
    return t


def _vmem_limit_bytes():
    """Per-generation VMEM budget: ~3/4 of physical, capped (v7x=64MiB, v5e/v6e=128MiB)."""
    try:
        cap = int(pltpu.get_tpu_info().vmem_capacity_bytes)
        return int(max(min(cap * 3 // 4, 100 * 1024 * 1024), 32 * 1024 * 1024))
    except Exception:
        return 48 * 1024 * 1024


# ------------------------------ wrapper ------------------------------

def residual_block_with_stride(x_nchw, params, stride=2, row_tile=None,
                               compute_dtype=jnp.bfloat16, out_dtype=None):
    # TODO(synk): stride=1 variant (identity skip) is not implemented; the
    # CompressAI module default (stride=2) is what this kernel covers.
    assert stride == 2, "only the module-default stride=2 is implemented"
    x = jnp.transpose(x_nchw, (0, 2, 3, 1))                    # NCHW -> NHWC
    N, H, W, Cin = x.shape
    assert H % 2 == 0 and W % 2 == 0, "even spatial dims required for stride 2"
    Ho, Wo = H // 2, W // 2
    assert Wo % 8 == 0, "Wo must be a multiple of 8 (sublane-aligned reshapes)"
    Cout = params["w1"].shape[-1]
    out_dtype = x.dtype if out_dtype is None else out_dtype    # pass bf16 if downstream accepts

    TRo = _pick_row_tile(Ho) if row_tile is None else row_tile
    assert Ho % TRo == 0  # TODO(synk): masked tail strips for non-divisible Ho
    S = Ho // TRo

    cdt = compute_dtype
    x_ee, x_eo, x_oe, x_oo = _prep_inputs(x, cdt)

    # weights: conv weights pre-folded to (9*C, Cout) matmul layout in compute dtype;
    # biases/beta and the GDN gamma stay f32 (GDN accuracy).
    w1 = params["w1"].reshape(9 * Cin, Cout).astype(cdt)       # (ki,kj,cin)-major K
    w2 = params["w2"].reshape(9 * Cout, Cout).astype(cdt)
    gma = params["gamma"].astype(jnp.float32)                  # (in_ch, out_ch) = torch gamma.T
    wsk = params["wskip"].astype(cdt)                          # (Cin, Cout)
    b1 = params["b1"].reshape(1, Cout).astype(jnp.float32)
    b2 = params["b2"].reshape(1, Cout).astype(jnp.float32)
    beta = params["beta"].reshape(1, Cout).astype(jnp.float32)
    bsk = params["bskip"].reshape(1, Cout).astype(jnp.float32)

    def img_spec(rows):
        # index map ignores the strip axis -> DMA'd once per image (no re-fetch).
        return pl.BlockSpec((None, rows, Wo + 1, Cin), lambda n, r: (n, 0, 0, 0))

    def full_spec(shape):
        return pl.BlockSpec(shape, lambda n, r: (0,) * len(shape))

    kernel = _make_kernel(TRo, Wo, Cin, Cout, S, cdt)
    out = pl.pallas_call(
        kernel,
        out_shape=jax.ShapeDtypeStruct((N, Ho * Wo, Cout), out_dtype),
        grid_spec=pltpu.PrefetchScalarGridSpec(
            num_scalar_prefetch=0,
            grid=(N, S),
            in_specs=[img_spec(Ho + 3), img_spec(Ho + 3),
                      img_spec(Ho + 2), img_spec(Ho + 2),
                      full_spec((9 * Cin, Cout)), full_spec((1, Cout)),
                      full_spec((9 * Cout, Cout)), full_spec((1, Cout)),
                      full_spec((Cout, Cout)), full_spec((1, Cout)),
                      full_spec((Cin, Cout)), full_spec((1, Cout))],
            out_specs=pl.BlockSpec((None, TRo * Wo, Cout), lambda n, r: (n, r, 0)),
        ),
        compiler_params=pltpu.CompilerParams(
            dimension_semantics=("parallel", "parallel"),
            vmem_limit_bytes=_vmem_limit_bytes()),
    )(x_ee, x_eo, x_oe, x_oo, w1, b1, w2, b2, gma, beta, wsk, bsk)

    out = out.reshape(N, Ho, Wo, Cout)
    return jnp.transpose(out, (0, 3, 1, 2))                    # NHWC -> NCHW


# ------------------------------ params & reference ------------------------------

def init_params(key, in_ch, out_ch):
    ks = jax.random.split(key, 6)
    return {
        "w1": 0.1 * jax.random.normal(ks[0], (3, 3, in_ch, out_ch), jnp.float32),
        "b1": 0.05 * jax.random.normal(ks[1], (out_ch,), jnp.float32),
        "w2": 0.1 * jax.random.normal(ks[2], (3, 3, out_ch, out_ch), jnp.float32),
        "b2": 0.05 * jax.random.normal(ks[3], (out_ch,), jnp.float32),
        # GDN effective defaults: beta = 1, gamma = 0.1 * I.  NOTE: `gamma` is in
        # (in_ch, out_ch) matmul layout; trained CompressAI weights must be passed
        # transposed (and already re-parametrized / non-negative).
        "gamma": 0.1 * jnp.eye(out_ch, dtype=jnp.float32),
        "beta": jnp.ones((out_ch,), jnp.float32),
        "wskip": 0.1 * jax.random.normal(ks[4], (in_ch, out_ch), jnp.float32),
        "bskip": 0.05 * jax.random.normal(ks[5], (out_ch,), jnp.float32),
    }


def reference(x_nchw, params, stride=2):
    x = jnp.transpose(x_nchw, (0, 2, 3, 1))
    dn = ("NHWC", "HWIO", "NHWC")
    out = lax.conv_general_dilated(x, params["w1"], (stride, stride),
                                   ((1, 1), (1, 1)), dimension_numbers=dn) + params["b1"]
    out = jnp.where(out >= 0, out, NEG_SLOPE * out)
    out = lax.conv_general_dilated(out, params["w2"], (1, 1),
                                   ((1, 1), (1, 1)), dimension_numbers=dn) + params["b2"]
    norm = lax.conv_general_dilated(out * out, params["gamma"][None, None], (1, 1),
                                    ((0, 0), (0, 0)), dimension_numbers=dn) + params["beta"]
    out = out * lax.rsqrt(norm)
    identity = lax.conv_general_dilated(x, params["wskip"][None, None], (stride, stride),
                                        ((0, 0), (0, 0)), dimension_numbers=dn) + params["bskip"]
    return jnp.transpose(out + identity, (0, 3, 1, 2))


if __name__ == "__main__":
    key = jax.random.PRNGKey(0)
    kx, kp = jax.random.split(key)
    N, Cin, H, W = 2, 4, 16, 16
    Cout, stride = 8, 2

    x = jax.random.normal(kx, (N, Cin, H, W), jnp.float32)     # NCHW input
    params = init_params(kp, Cin, Cout)
    ref = reference(x, params, stride=stride)

    # exact-semantics check (f32 operands), multi-strip grid exercises the full
    # first/interior/last-strip halo + boundary-masking logic.
    out_f32 = jax.block_until_ready(
        residual_block_with_stride(x, params, stride=stride, row_tile=2,
                                   compute_dtype=jnp.float32))
    assert out_f32.shape == (N, Cout, H // stride, W // stride), out_f32.shape
    assert jnp.allclose(out_f32, ref, atol=1e-4, rtol=1e-4), \
        float(jnp.max(jnp.abs(out_f32 - ref)))

    # default tiling (single strip at this size), f32 exactness again
    out_f32b = jax.block_until_ready(
        residual_block_with_stride(x, params, stride=stride,
                                   compute_dtype=jnp.float32))
    assert jnp.allclose(out_f32b, ref, atol=1e-4, rtol=1e-4), \
        float(jnp.max(jnp.abs(out_f32b - ref)))

    # performance configuration: bf16 MXU operands, f32 accumulation / GDN / add
    out_bf16 = jax.block_until_ready(
        residual_block_with_stride(x, params, stride=stride,
                                   compute_dtype=jnp.bfloat16))
    assert out_bf16.shape == (N, Cout, H // stride, W // stride), out_bf16.shape
    assert jnp.allclose(out_bf16, ref, atol=5e-2, rtol=5e-2), \
        float(jnp.max(jnp.abs(out_bf16 - ref)))

    print("KERNEL_OK")
</pallas_src>

<mosaic_0001>
module attributes {stable_mosaic.version = 11 : i64} {
  func.func @kernel(%arg0: i32, %arg1: i32, %arg2: memref<1x11x9x4xf32, #tpu.memory_space<vmem>>, %arg3: memref<1x11x9x4xf32, #tpu.memory_space<vmem>>, %arg4: memref<1x10x9x4xf32, #tpu.memory_space<vmem>>, %arg5: memref<1x10x9x4xf32, #tpu.memory_space<vmem>>, %arg6: memref<36x8xf32, #tpu.memory_space<vmem>>, %arg7: memref<1x8xf32, #tpu.memory_space<vmem>>, %arg8: memref<72x8xf32, #tpu.memory_space<vmem>>, %arg9: memref<1x8xf32, #tpu.memory_space<vmem>>, %arg10: memref<8x8xf32, #tpu.memory_space<vmem>>, %arg11: memref<1x8xf32, #tpu.memory_space<vmem>>, %arg12: memref<4x8xf32, #tpu.memory_space<vmem>>, %arg13: memref<1x8xf32, #tpu.memory_space<vmem>>, %arg14: memref<1x16x8xf32, #tpu.memory_space<vmem>>) attributes {dimension_semantics = [#tpu.dimension_semantics<parallel>, #tpu.dimension_semantics<parallel>], iteration_bounds = array<i64: 2, 4>, scalar_prefetch = 0 : i64, scratch_operands = 0 : i64, tpu.core_type = #tpu.core_type<tc>, window_params = [{transform_indices = @transform_0, window_bounds = array<i64: 1, 11, 9, 4>}, {transform_indices = @transform_1, window_bounds = array<i64: 1, 11, 9, 4>}, {transform_indices = @transform_2, window_bounds = array<i64: 1, 10, 9, 4>}, {transform_indices = @transform_3, window_bounds = array<i64: 1, 10, 9, 4>}, {pipeline_mode = #tpu.pipeline_mode<synchronous>, transform_indices = @transform_4, window_bounds = array<i64: 36, 8>}, {pipeline_mode = #tpu.pipeline_mode<synchronous>, transform_indices = @transform_5, window_bounds = array<i64: 1, 8>}, {pipeline_mode = #tpu.pipeline_mode<synchronous>, transform_indices = @transform_6, window_bounds = array<i64: 72, 8>}, {pipeline_mode = #tpu.pipeline_mode<synchronous>, transform_indices = @transform_7, window_bounds = array<i64: 1, 8>}, {pipeline_mode = #tpu.pipeline_mode<synchronous>, transform_indices = @transform_8, window_bounds = array<i64: 8, 8>}, {pipeline_mode = #tpu.pipeline_mode<synchronous>, transform_indices = @transform_9, window_bounds = array<i64: 1, 8>}, {pipeline_mode = #tpu.pipeline_mode<synchronous>, transform_indices = @transform_10, window_bounds = array<i64: 4, 8>}, {pipeline_mode = #tpu.pipeline_mode<synchronous>, transform_indices = @transform_11, window_bounds = array<i64: 1, 8>}, {transform_indices = @transform_12, window_bounds = array<i64: 1, 16, 8>}]} {
    %c2_i32 = arith.constant 2 : i32
    %0 = arith.muli %c2_i32, %arg1 : i32
    %1 = tpu.assume_multiple %0, 2 : i32
    %c0 = arith.constant 0 : index
    %2 = arith.index_cast %1 : i32 to index
    %c0_0 = arith.constant 0 : index
    %c0_1 = arith.constant 0 : index
    %3 = vector.load %arg2[%c0, %2, %c0_0, %c0_1] : memref<1x11x9x4xf32, #tpu.memory_space<vmem>>, vector<1x5x9x4xf32>
    %4 = vector.shape_cast %3 : vector<1x5x9x4xf32> to vector<5x9x4xf32>
    %c0_2 = arith.constant 0 : index
    %5 = arith.index_cast %1 : i32 to index
    %c0_3 = arith.constant 0 : index
    %c0_4 = arith.constant 0 : index
    %6 = vector.load %arg3[%c0_2, %5, %c0_3, %c0_4] : memref<1x11x9x4xf32, #tpu.memory_space<vmem>>, vector<1x5x9x4xf32>
    %7 = vector.shape_cast %6 : vector<1x5x9x4xf32> to vector<5x9x4xf32>
    %c0_5 = arith.constant 0 : index
    %8 = arith.index_cast %1 : i32 to index
    %c0_6 = arith.constant 0 : index
    %c0_7 = arith.constant 0 : index
    %9 = vector.load %arg4[%c0_5, %8, %c0_6, %c0_7] : memref<1x10x9x4xf32, #tpu.memory_space<vmem>>, vector<1x4x9x4xf32>
    %10 = vector.shape_cast %9 : vector<1x4x9x4xf32> to vector<4x9x4xf32>
    %c0_8 = arith.constant 0 : index
    %11 = arith.index_cast %1 : i32 to index
    %c0_9 = arith.constant 0 : index
    %c0_10 = arith.constant 0 : index
    %12 = vector.load %arg5[%c0_8, %11, %c0_9, %c0_10] : memref<1x10x9x4xf32, #tpu.memory_space<vmem>>, vector<1x4x9x4xf32>
    %13 = vector.shape_cast %12 : vector<1x4x9x4xf32> to vector<4x9x4xf32>
    %14 = vector.extract_strided_slice %4 {offsets = [0, 0, 0], sizes = [5, 8, 4], strides = [1, 1, 1]} : vector<5x9x4xf32> to vector<5x8x4xf32>
    %15 = vector.extract_strided_slice %4 {offsets = [0, 1, 0], sizes = [5, 8, 4], strides = [1, 1, 1]} : vector<5x9x4xf32> to vector<5x8x4xf32>
    %16 = vector.extract_strided_slice %7 {offsets = [0, 0, 0], sizes = [5, 8, 4], strides = [1, 1, 1]} : vector<5x9x4xf32> to vector<5x8x4xf32>
    %17 = vector.extract_strided_slice %10 {offsets = [0, 0, 0], sizes = [4, 8, 4], strides = [1, 1, 1]} : vector<4x9x4xf32> to vector<4x8x4xf32>
    %18 = vector.extract_strided_slice %10 {offsets = [0, 1, 0], sizes = [4, 8, 4], strides = [1, 1, 1]} : vector<4x9x4xf32> to vector<4x8x4xf32>
    %19 = vector.extract_strided_slice %13 {offsets = [0, 0, 0], sizes = [4, 8, 4], strides = [1, 1, 1]} : vector<4x9x4xf32> to vector<4x8x4xf32>
    %20 = vector.extract_strided_slice %14 {offsets = [0, 0, 0], sizes = [4, 8, 4], strides = [1, 1, 1]} : vector<5x8x4xf32> to vector<4x8x4xf32>
    %21 = vector.extract_strided_slice %16 {offsets = [0, 0, 0], sizes = [4, 8, 4], strides = [1, 1, 1]} : vector<5x8x4xf32> to vector<4x8x4xf32>
    %22 = vector.extract_strided_slice %15 {offsets = [0, 0, 0], sizes = [4, 8, 4], strides = [1, 1, 1]} : vector<5x8x4xf32> to vector<4x8x4xf32>
    %23 = vector.extract_strided_slice %14 {offsets = [1, 0, 0], sizes = [4, 8, 4], strides = [1, 1, 1]} : vector<5x8x4xf32> to vector<4x8x4xf32>
    %24 = vector.extract_strided_slice %16 {offsets = [1, 0, 0], sizes = [4, 8, 4], strides = [1, 1, 1]} : vector<5x8x4xf32> to vector<4x8x4xf32>
    %25 = vector.extract_strided_slice %15 {offsets = [1, 0, 0], sizes = [4, 8, 4], strides = [1, 1, 1]} : vector<5x8x4xf32> to vector<4x8x4xf32>
    %26 = tpu.concatenate %20, %21, %22, %17, %19, %18, %23, %24, %25 in 2 : vector<4x8x4xf32>, vector<4x8x4xf32>, vector<4x8x4xf32>, vector<4x8x4xf32>, vector<4x8x4xf32>, vector<4x8x4xf32>, vector<4x8x4xf32>, vector<4x8x4xf32>, vector<4x8x4xf32> -> vector<4x8x36xf32>
    %27 = vector.shape_cast %26 : vector<4x8x36xf32> to vector<32x36xf32>
    %c0_11 = arith.constant 0 : index
    %c0_12 = arith.constant 0 : index
    %28 = vector.load %arg6[%c0_11, %c0_12] : memref<36x8xf32, #tpu.memory_space<vmem>>, vector<36x8xf32>
    %cst = arith.constant dense<0.000000e+00> : vector<32x8xf32>
    %29 = tpu.matmul %27, %28, %cst {dimension_numbers = #tpu.dot_dimension_numbers<[1], [0], [0], [1], [0, 0, 1, 1], [], []>} : vector<32x36xf32>, vector<36x8xf32>, vector<32x8xf32> -> vector<32x8xf32>
    %c0_13 = arith.constant 0 : index
    %c0_14 = arith.constant 0 : index
    %30 = vector.load %arg7[%c0_13, %c0_14] : memref<1x8xf32, #tpu.memory_space<vmem>>, vector<1x8xf32>
    %31 = vector.broadcast %30 : vector<1x8xf32> to vector<32x8xf32>
    %32 = arith.addf %29, %31 : vector<32x8xf32>
    %cst_15 = arith.constant 0.000000e+00 : f32
    %33 = vector.broadcast %cst_15 : f32 to vector<32x8xf32>
    %34 = arith.cmpf oge, %32, %33 : vector<32x8xf32>
    %cst_16 = arith.constant 0.00999999977 : f32
    %35 = vector.broadcast %cst_16 : f32 to vector<32x8xf32>
    %36 = arith.mulf %35, %32 : vector<32x8xf32>
    %37 = arith.select %34, %32, %36 : vector<32x8xi1>, vector<32x8xf32>
    %38 = tpu.iota {dimensions = array<i32: 0>} : vector<32x8xi32>
    %c0_i32 = arith.constant 0 : i32
    %39 = arith.cmpi eq, %arg1, %c0_i32 : i32
    %c8_i32 = arith.constant 8 : i32
    %40 = vector.broadcast %c8_i32 : i32 to vector<32x8xi32>
    %41 = arith.cmpi slt, %38, %40 : vector<32x8xi32>
    %42 = vector.broadcast %39 : i1 to vector<32x8xi1>
    %43 = arith.andi %42, %41 : vector<32x8xi1>
    %c3_i32 = arith.constant 3 : i32
    %44 = arith.cmpi eq, %arg1, %c3_i32 : i32
    %c24_i32 = arith.constant 24 : i32
    %45 = vector.broadcast %c24_i32 : i32 to vector<32x8xi32>
    %46 = arith.cmpi sge, %38, %45 : vector<32x8xi32>
    %47 = vector.broadcast %44 : i1 to vector<32x8xi1>
    %48 = arith.andi %47, %46 : vector<32x8xi1>
    %49 = arith.ori %43, %48 : vector<32x8xi1>
    %cst_17 = arith.constant 0.000000e+00 : f32
    %50 = vector.broadcast %cst_17 : f32 to vector<32x8xf32>
    %51 = arith.select %49, %50, %37 : vector<32x8xi1>, vector<32x8xf32>
    %52 = vector.shape_cast %51 : vector<32x8xf32> to vector<4x8x8xf32>
    %cst_18 = arith.constant 0.000000e+00 : f32
    %53 = vector.broadcast %cst_18 : f32 to vector<4x1x8xf32>
    %54 = vector.extract_strided_slice %52 {offsets = [0, 0, 0], sizes = [4, 7, 8], strides = [1, 1, 1]} : vector<4x8x8xf32> to vector<4x7x8xf32>
    %55 = tpu.concatenate %53, %54 in 1 : vector<4x1x8xf32>, vector<4x7x8xf32> -> vector<4x8x8xf32>
    %56 = vector.extract_strided_slice %52 {offsets = [0, 1, 0], sizes = [4, 7, 8], strides = [1, 1, 1]} : vector<4x8x8xf32> to vector<4x7x8xf32>
    %57 = tpu.concatenate %56, %53 in 1 : vector<4x7x8xf32>, vector<4x1x8xf32> -> vector<4x8x8xf32>
    %58 = vector.extract_strided_slice %55 {offsets = [0, 0, 0], sizes = [2, 8, 8], strides = [1, 1, 1]} : vector<4x8x8xf32> to vector<2x8x8xf32>
    %59 = vector.extract_strided_slice %52 {offsets = [0, 0, 0], sizes = [2, 8, 8], strides = [1, 1, 1]} : vector<4x8x8xf32> to vector<2x8x8xf32>
    %60 = vector.extract_strided_slice %57 {offsets = [0, 0, 0], sizes = [2, 8, 8], strides = [1, 1, 1]} : vector<4x8x8xf32> to vector<2x8x8xf32>
    %61 = vector.extract_strided_slice %55 {offsets = [1, 0, 0], sizes = [2, 8, 8], strides = [1, 1, 1]} : vector<4x8x8xf32> to vector<2x8x8xf32>
    %62 = vector.extract_strided_slice %52 {offsets = [1, 0, 0], sizes = [2, 8, 8], strides = [1, 1, 1]} : vector<4x8x8xf32> to vector<2x8x8xf32>
    %63 = vector.extract_strided_slice %57 {offsets = [1, 0, 0], sizes = [2, 8, 8], strides = [1, 1, 1]} : vector<4x8x8xf32> to vector<2x8x8xf32>
    %64 = vector.extract_strided_slice %55 {offsets = [2, 0, 0], sizes = [2, 8, 8], strides = [1, 1, 1]} : vector<4x8x8xf32> to vector<2x8x8xf32>
    %65 = vector.extract_strided_slice %52 {offsets = [2, 0, 0], sizes = [2, 8, 8], strides = [1, 1, 1]} : vector<4x8x8xf32> to vector<2x8x8xf32>
    %66 = vector.extract_strided_slice %57 {offsets = [2, 0, 0], sizes = [2, 8, 8], strides = [1, 1, 1]} : vector<4x8x8xf32> to vector<2x8x8xf32>
    %67 = tpu.concatenate %58, %59, %60, %61, %62, %63, %64, %65, %66 in 2 : vector<2x8x8xf32>, vector<2x8x8xf32>, vector<2x8x8xf32>, vector<2x8x8xf32>, vector<2x8x8xf32>, vector<2x8x8xf32>, vector<2x8x8xf32>, vector<2x8x8xf32>, vector<2x8x8xf32> -> vector<2x8x72xf32>
    %68 = vector.shape_cast %67 : vector<2x8x72xf32> to vector<16x72xf32>
    %c0_19 = arith.constant 0 : index
    %c0_20 = arith.constant 0 : index
    %69 = vector.load %arg8[%c0_19, %c0_20] : memref<72x8xf32, #tpu.memory_space<vmem>>, vector<72x8xf32>
    %cst_21 = arith.constant dense<0.000000e+00> : vector<16x8xf32>
    %70 = tpu.matmul %68, %69, %cst_21 {dimension_numbers = #tpu.dot_dimension_numbers<[1], [0], [0], [1], [0, 0, 1, 1], [], []>} : vector<16x72xf32>, vector<72x8xf32>, vector<16x8xf32> -> vector<16x8xf32>
    %c0_22 = arith.constant 0 : index
    %c0_23 = arith.constant 0 : index
    %71 = vector.load %arg9[%c0_22, %c0_23] : memref<1x8xf32, #tpu.memory_space<vmem>>, vector<1x8xf32>
    %72 = vector.broadcast %71 : vector<1x8xf32> to vector<16x8xf32>
    %73 = arith.addf %70, %72 : vector<16x8xf32>
    %74 = arith.mulf %73, %73 : vector<16x8xf32>
    %c0_24 = arith.constant 0 : index
    %c0_25 = arith.constant 0 : index
    %75 = vector.load %arg10[%c0_24, %c0_25] : memref<8x8xf32, #tpu.memory_space<vmem>>, vector<8x8xf32>
    %cst_26 = arith.constant dense<0.000000e+00> : vector<16x8xf32>
    %76 = tpu.matmul %74, %75, %cst_26 {dimension_numbers = #tpu.dot_dimension_numbers<[1], [0], [0], [1], [0, 0, 1, 1], [], []>} : vector<16x8xf32>, vector<8x8xf32>, vector<16x8xf32> -> vector<16x8xf32>
    %c0_27 = arith.constant 0 : index
    %c0_28 = arith.constant 0 : index
    %77 = vector.load %arg11[%c0_27, %c0_28] : memref<1x8xf32, #tpu.memory_space<vmem>>, vector<1x8xf32>
    %78 = vector.broadcast %77 : vector<1x8xf32> to vector<16x8xf32>
    %79 = arith.addf %76, %78 : vector<16x8xf32>
    %80 = math.rsqrt %79 : vector<16x8xf32>
    %81 = arith.mulf %73, %80 : vector<16x8xf32>
    %82 = vector.extract_strided_slice %19 {offsets = [1, 0, 0], sizes = [2, 8, 4], strides = [1, 1, 1]} : vector<4x8x4xf32> to vector<2x8x4xf32>
    %83 = vector.shape_cast %82 : vector<2x8x4xf32> to vector<16x4xf32>
    %c0_29 = arith.constant 0 : index
    %c0_30 = arith.constant 0 : index
    %84 = vector.load %arg12[%c0_29, %c0_30] : memref<4x8xf32, #tpu.memory_space<vmem>>, vector<4x8xf32>
    %cst_31 = arith.constant dense<0.000000e+00> : vector<16x8xf32>
    %85 = tpu.matmul %83, %84, %cst_31 {dimension_numbers = #tpu.dot_dimension_numbers<[1], [0], [0], [1], [0, 0, 1, 1], [], []>} : vector<16x4xf32>, vector<4x8xf32>, vector<16x8xf32> -> vector<16x8xf32>
    %c0_32 = arith.constant 0 : index
    %c0_33 = arith.constant 0 : index
    %86 = vector.load %arg13[%c0_32, %c0_33] : memref<1x8xf32, #tpu.memory_space<vmem>>, vector<1x8xf32>
    %87 = vector.broadcast %86 : vector<1x8xf32> to vector<16x8xf32>
    %88 = arith.addf %85, %87 : vector<16x8xf32>
    %89 = arith.addf %81, %88 : vector<16x8xf32>
    %c0_34 = arith.constant 0 : index
    %c0_35 = arith.constant 0 : index
    %c0_36 = arith.constant 0 : index
    %90 = vector.load %arg14[%c0_34, %c0_35, %c0_36] : memref<1x16x8xf32, #tpu.memory_space<vmem>>, vector<1x16x8xf32>
    %91 = vector.shape_cast %90 : vector<1x16x8xf32> to vector<16x8xf32>
    %92 = vector.shape_cast %89 : vector<16x8xf32> to vector<1x16x8xf32>
    tpu.vector_store %arg14[%c0_34, %c0_35, %c0_36], %92 {strides = array<i32>} : memref<1x16x8xf32, #tpu.memory_space<vmem>>, vector<1x16x8xf32>,
    return
  }
  func.func @transform_0(%arg0: i32, %arg1: i32) -> (i32, i32, i32, i32) {
    %c0_i32 = arith.constant 0 : i32
    %c0_i32_0 = arith.constant 0 : i32
    %c0_i32_1 = arith.constant 0 : i32
    %c0_i32_2 = arith.constant 0 : i32
    return %arg0, %c0_i32, %c0_i32_0, %c0_i32_1 : i32, i32, i32, i32
  }
  func.func @transform_1(%arg0: i32, %arg1: i32) -> (i32, i32, i32, i32) {
    %c0_i32 = arith.constant 0 : i32
    %c0_i32_0 = arith.constant 0 : i32
    %c0_i32_1 = arith.constant 0 : i32
    %c0_i32_2 = arith.constant 0 : i32
    return %arg0, %c0_i32, %c0_i32_0, %c0_i32_1 : i32, i32, i32, i32
  }
  func.func @transform_2(%arg0: i32, %arg1: i32) -> (i32, i32, i32, i32) {
    %c0_i32 = arith.constant 0 : i32
    %c0_i32_0 = arith.constant 0 : i32
    %c0_i32_1 = arith.constant 0 : i32
    %c0_i32_2 = arith.constant 0 : i32
    return %arg0, %c0_i32, %c0_i32_0, %c0_i32_1 : i32, i32, i32, i32
  }
  func.func @transform_3(%arg0: i32, %arg1: i32) -> (i32, i32, i32, i32) {
    %c0_i32 = arith.constant 0 : i32
    %c0_i32_0 = arith.constant 0 : i32
    %c0_i32_1 = arith.constant 0 : i32
    %c0_i32_2 = arith.constant 0 : i32
    return %arg0, %c0_i32, %c0_i32_0, %c0_i32_1 : i32, i32, i32, i32
  }
  func.func @transform_4(%arg0: i32, %arg1: i32) -> (i32, i32) {
    %c0_i32 = arith.constant 0 : i32
    %c0_i32_0 = arith.constant 0 : i32
    %c0_i32_1 = arith.constant 0 : i32
    return %c0_i32, %c0_i32_0 : i32, i32
  }
  func.func @transform_5(%arg0: i32, %arg1: i32) -> (i32, i32) {
    %c0_i32 = arith.constant 0 : i32
    %c0_i32_0 = arith.constant 0 : i32
    %c0_i32_1 = arith.constant 0 : i32
    return %c0_i32, %c0_i32_0 : i32, i32
  }
  func.func @transform_6(%arg0: i32, %arg1: i32) -> (i32, i32) {
    %c0_i32 = arith.constant 0 : i32
    %c0_i32_0 = arith.constant 0 : i32
    %c0_i32_1 = arith.constant 0 : i32
    return %c0_i32, %c0_i32_0 : i32, i32
  }
  func.func @transform_7(%arg0: i32, %arg1: i32) -> (i32, i32) {
    %c0_i32 = arith.constant 0 : i32
    %c0_i32_0 = arith.constant 0 : i32
    %c0_i32_1 = arith.constant 0 : i32
    return %c0_i32, %c0_i32_0 : i32, i32
  }
  func.func @transform_8(%arg0: i32, %arg1: i32) -> (i32, i32) {
    %c0_i32 = arith.constant 0 : i32
    %c0_i32_0 = arith.constant 0 : i32
    %c0_i32_1 = arith.constant 0 : i32
    return %c0_i32, %c0_i32_0 : i32, i32
  }
  func.func @transform_9(%arg0: i32, %arg1: i32) -> (i32, i32) {
    %c0_i32 = arith.constant 0 : i32
    %c0_i32_0 = arith.constant 0 : i32
    %c0_i32_1 = arith.constant 0 : i32
    return %c0_i32, %c0_i32_0 : i32, i32
  }
  func.func @transform_10(%arg0: i32, %arg1: i32) -> (i32, i32) {
    %c0_i32 = arith.constant 0 : i32
    %c0_i32_0 = arith.constant 0 : i32
    %c0_i32_1 = arith.constant 0 : i32
    return %c0_i32, %c0_i32_0 : i32, i32
  }
  func.func @transform_11(%arg0: i32, %arg1: i32) -> (i32, i32) {
    %c0_i32 = arith.constant 0 : i32
    %c0_i32_0 = arith.constant 0 : i32
    %c0_i32_1 = arith.constant 0 : i32
    return %c0_i32, %c0_i32_0 : i32, i32
  }
  func.func @transform_12(%arg0: i32, %arg1: i32) -> (i32, i32, i32) {
    %c0_i32 = arith.constant 0 : i32
    %c0_i32_0 = arith.constant 0 : i32
    return %arg0, %arg1, %c0_i32 : i32, i32, i32
  }
}

</mosaic_0001>

<llo_original>
// kernel: tpu_custom_call.1
$region0: #{tpu_custom_call.1}
  #allocation0 [shape = 'u32[]', space=smem, size = 0x4, offset = 0x4, fixed_abs, tag = 'smem constant byte address 0x4 - core index']
  #allocation1 [shape = 'u32[144,128]{1,0:T(1,128)}', space=vmem, size = 0x12000, scoped, tag = 'internal scratch']
  %s0 = inlined_call_operand.vmem [shape: f32[2,11,9,4], index: 0, kind: input, shape index: {}]
  %s1 = inlined_call_operand.vmem [shape: f32[2,11,9,4], index: 1, kind: input, shape index: {}]
  %s2 = inlined_call_operand.vmem [shape: f32[2,10,9,4], index: 2, kind: input, shape index: {}]
  %s3 = inlined_call_operand.vmem [shape: f32[2,10,9,4], index: 3, kind: input, shape index: {}]
  %s4 = inlined_call_operand.vmem [shape: f32[36,8], index: 4, kind: input, shape index: {}]
  %s5 = inlined_call_operand.vmem [shape: f32[1,8], index: 5, kind: input, shape index: {}]
  %s6 = inlined_call_operand.vmem [shape: f32[72,8], index: 6, kind: input, shape index: {}]
  %s7 = inlined_call_operand.vmem [shape: f32[1,8], index: 7, kind: input, shape index: {}]
  %s8 = inlined_call_operand.vmem [shape: f32[8,8], index: 8, kind: input, shape index: {}]
  %s9 = inlined_call_operand.vmem [shape: f32[1,8], index: 9, kind: input, shape index: {}]
  %s10 = inlined_call_operand.vmem [shape: f32[4,8], index: 10, kind: input, shape index: {}]
  %s11 = inlined_call_operand.vmem [shape: f32[1,8], index: 11, kind: input, shape index: {}]
  %s12 = inlined_call_operand.vmem [shape: f32[2,64,8], index: 12, kind: output, shape index: {}]
  %s13 = sld [smem:[#allocation0]]
  $region81: #{tpu_custom_call.1} parent=0
    _
  %s15 = ssub.s32 1, %s13
  %s16 = scalar_select 0, %s15, %s13
  loop: start=0, step=1, limit=10
  $region2: #{tpu_custom_call.1} parent=0 // loop_pre_header
    _
  $region3: #{tpu_custom_call.1} parent=0 // loop_header
    %s18 = sphi 0, %s22
    %p19 = scmp.ge.s32.totalorder %s18, 10
    %s25 = sphi 0, %s37
    %s26 = sphi 0, %s33
    %s27 = sphi 0, %s25
    %s28 = sphi 0, %s26
    %s29 = sphi 0, %s27
    %s30 = sphi 0, %s28
    %s40 = sphi 0, %s42
    %s43 = sphi 0, %s40
    %s44 = sphi 0, %s43
    %s60 = sphi 0, %s44
    %s66 = sphi 0, %s68
    %s69 = sphi 0, %s66
    %s70 = sphi 0, %s69
    %s86 = sphi 0, %s70
    %s92 = sphi 0, %s94
    %s95 = sphi 0, %s92
    %s96 = sphi 0, %s95
    %s112 = sphi 0, %s96
    %s118 = sphi 0, %s120
    %s121 = sphi 0, %s118
    %s122 = sphi 0, %s121
    %s138 = sphi 0, %s122
    %s142 = sphi 0, %s142
    %s144 = sphi 0, %s142
    %s145 = sphi 0, %s144
    %s159 = sphi 0, %s145
    %s163 = sphi 0, %s163
    %s165 = sphi 0, %s163
    %s166 = sphi 0, %s165
    %s180 = sphi 0, %s166
    %s184 = sphi 0, %s184
    %s186 = sphi 0, %s184
    %s187 = sphi 0, %s186
    %s201 = sphi 0, %s187
    %s205 = sphi 0, %s205
    %s207 = sphi 0, %s205
    %s208 = sphi 0, %s207
    %s222 = sphi 0, %s208
    %s226 = sphi 0, %s226
    %s228 = sphi 0, %s226
    %s229 = sphi 0, %s228
    %s243 = sphi 0, %s229
    %s247 = sphi 0, %s247
    %s249 = sphi 0, %s247
    %s250 = sphi 0, %s249
    %s264 = sphi 0, %s250
    %s268 = sphi 0, %s268
    %s270 = sphi 0, %s268
    %s271 = sphi 0, %s270
    %s285 = sphi 0, %s271
    %s289 = sphi 0, %s289
    %s291 = sphi 0, %s289
    %s292 = sphi 0, %s291
    %s306 = sphi 0, %s292
    %s314 = sphi 0, %s316
    %s317 = sphi 0, %s314
    %s318 = sphi 0, %s317
    %s334 = sphi 0, %s318
  $region4: #{tpu_custom_call.1} parent=0 // loop_header_branch
    %21 = sbr.rel (%p19) target = $region8
  $region5: #{tpu_custom_call.1} parent=0 // loop_body
    %s23 = ssub.s32 %s18, 1
    %s24 = ssub.s32 %s18, 2
    %s31 = sadd.s32 1, %s26
    %p32 = scmp.ge.s32.totalorder %s31, 4
    %s33 = scalar_select %p32, 0, %s31
    %s34 = sadd.s32 1, %s25
    %s35 = scalar_select %p32, %s34, %s25
    %p36 = scmp.ge.s32.totalorder %s35, 2
    %s37 = scalar_select %p36, 0, %s35
    %s38 = ssub.s32 %s25, %s37
    %p39 = scmp.eq.s32.totalorder %s38, 0
    %s41 = sadd.s32 %s40, 1
    %s42 = scalar_select %p39, %s40, %s41
    %p45 = pneg %p39
    %p46 = scmp.eq.s32.totalorder %s18, 7
    %p47 = por %p45, %p46
    %p48 = scmp.ne.s32.totalorder %s40, %s43
    %p49 = scmp.eq.s32.totalorder %s18, 0
    %p50 = por %p48, %p49
    %p51 = scmp.ne.s32.totalorder %s40, %s43
    %p52 = scmp.eq.s32.totalorder %s23, 7
    %p53 = por %p51, %p52
    %p54 = scmp.ne.s32.totalorder %s43, %s44
    %p55 = scmp.eq.s32.totalorder %s23, 0
    %p56 = por %p54, %p55
    %p57 = scmp.ne.s32.totalorder %s43, %s44
    %p58 = scmp.eq.s32.totalorder %s24, 7
    %p59 = por %p57, %p58
    %p61 = scmp.ne.s32.totalorder %s44, %s60
    %p62 = scmp.eq.s32.totalorder %s24, 0
    %p63 = por %p61, %p62
    %s64 = ssub.s32 %s25, %s37
    %p65 = scmp.eq.s32.totalorder %s64, 0
    %s67 = sadd.s32 %s66, 1
    %s68 = scalar_select %p65, %s66, %s67
    %p71 = pneg %p65
    %p72 = scmp.eq.s32.totalorder %s18, 7
    %p73 = por %p71, %p72
    %p74 = scmp.ne.s32.totalorder %s66, %s69
    %p75 = scmp.eq.s32.totalorder %s18, 0
    %p76 = por %p74, %p75
    %p77 = scmp.ne.s32.totalorder %s66, %s69
    %p78 = scmp.eq.s32.totalorder %s23, 7
    %p79 = por %p77, %p78
    %p80 = scmp.ne.s32.totalorder %s69, %s70
    %p81 = scmp.eq.s32.totalorder %s23, 0
    %p82 = por %p80, %p81
    %p83 = scmp.ne.s32.totalorder %s69, %s70
    %p84 = scmp.eq.s32.totalorder %s24, 7
    %p85 = por %p83, %p84
    %p87 = scmp.ne.s32.totalorder %s70, %s86
    %p88 = scmp.eq.s32.totalorder %s24, 0
    %p89 = por %p87, %p88
    %s90 = ssub.s32 %s25, %s37
    %p91 = scmp.eq.s32.totalorder %s90, 0
    %s93 = sadd.s32 %s92, 1
    %s94 = scalar_select %p91, %s92, %s93
    %p97 = pneg %p91
    %p98 = scmp.eq.s32.totalorder %s18, 7
    %p99 = por %p97, %p98
    %p100 = scmp.ne.s32.totalorder %s92, %s95
    %p101 = scmp.eq.s32.totalorder %s18, 0
    %p102 = por %p100, %p101
    %p103 = scmp.ne.s32.totalorder %s92, %s95
    %p104 = scmp.eq.s32.totalorder %s23, 7
    %p105 = por %p103, %p104
    %p106 = scmp.ne.s32.totalorder %s95, %s96
    %p107 = scmp.eq.s32.totalorder %s23, 0
    %p108 = por %p106, %p107
    %p109 = scmp.ne.s32.totalorder %s95, %s96
    %p110 = scmp.eq.s32.totalorder %s24, 7
    %p111 = por %p109, %p110
    %p113 = scmp.ne.s32.totalorder %s96, %s112
    %p114 = scmp.eq.s32.totalorder %s24, 0
    %p115 = por %p113, %p114
    %s116 = ssub.s32 %s25, %s37
    %p117 = scmp.eq.s32.totalorder %s116, 0
    %s119 = sadd.s32 %s118, 1
    %s120 = scalar_select %p117, %s118, %s119
    %p123 = pneg %p117
    %p124 = scmp.eq.s32.totalorder %s18, 7
    %p125 = por %p123, %p124
    %p126 = scmp.ne.s32.totalorder %s118, %s121
    %p127 = scmp.eq.s32.totalorder %s18, 0
    %p128 = por %p126, %p127
    %p129 = scmp.ne.s32.totalorder %s118, %s121
    %p130 = scmp.eq.s32.totalorder %s23, 7
    %p131 = por %p129, %p130
    %p132 = scmp.ne.s32.totalorder %s121, %s122
    %p133 = scmp.eq.s32.totalorder %s23, 0
    %p134 = por %p132, %p133
    %p135 = scmp.ne.s32.totalorder %s121, %s122
    %p136 = scmp.eq.s32.totalorder %s24, 7
    %p137 = por %p135, %p136
    %p139 = scmp.ne.s32.totalorder %s122, %s138
    %p140 = scmp.eq.s32.totalorder %s24, 0
    %p141 = por %p139, %p140
    %s143 = sadd.s32 %s142, 1
    %p146 = scmp.eq.s32.totalorder %s18, 7
    %p147 = scmp.ne.s32.totalorder %s142, %s144
    %p148 = scmp.eq.s32.totalorder %s18, 0
    %p149 = por %p147, %p148
    %p150 = scmp.ne.s32.totalorder %s142, %s144
    %p151 = scmp.eq.s32.totalorder %s23, 7
    %p152 = por %p150, %p151
    %p153 = scmp.ne.s32.totalorder %s144, %s145
    %p154 = scmp.eq.s32.totalorder %s23, 0
    %p155 = por %p153, %p154
    %p156 = scmp.ne.s32.totalorder %s144, %s145
    %p157 = scmp.eq.s32.totalorder %s24, 7
    %p158 = por %p156, %p157
    %p160 = scmp.ne.s32.totalorder %s145, %s159
    %p161 = scmp.eq.s32.totalorder %s24, 0
    %p162 = por %p160, %p161
    %s164 = sadd.s32 %s163, 1
    %p167 = scmp.eq.s32.totalorder %s18, 7
    %p168 = scmp.ne.s32.totalorder %s163, %s165
    %p169 = scmp.eq.s32.totalorder %s18, 0
    %p170 = por %p168, %p169
    %p171 = scmp.ne.s32.totalorder %s163, %s165
    %p172 = scmp.eq.s32.totalorder %s23, 7
    %p173 = por %p171, %p172
    %p174 = scmp.ne.s32.totalorder %s165, %s166
    %p175 = scmp.eq.s32.totalorder %s23, 0
    %p176 = por %p174, %p175
    %p177 = scmp.ne.s32.totalorder %s165, %s166
    %p178 = scmp.eq.s32.totalorder %s24, 7
    %p179 = por %p177, %p178
    %p181 = scmp.ne.s32.totalorder %s166, %s180
    %p182 = scmp.eq.s32.totalorder %s24, 0
    %p183 = por %p181, %p182
    %s185 = sadd.s32 %s184, 1
    %p188 = scmp.eq.s32.totalorder %s18, 7
    %p189 = scmp.ne.s32.totalorder %s184, %s186
    %p190 = scmp.eq.s32.totalorder %s18, 0
    %p191 = por %p189, %p190
    %p192 = scmp.ne.s32.totalorder %s184, %s186
    %p193 = scmp.eq.s32.totalorder %s23, 7
    %p194 = por %p192, %p193
    %p195 = scmp.ne.s32.totalorder %s186, %s187
    %p196 = scmp.eq.s32.totalorder %s23, 0
    %p197 = por %p195, %p196
    %p198 = scmp.ne.s32.totalorder %s186, %s187
    %p199 = scmp.eq.s32.totalorder %s24, 7
    %p200 = por %p198, %p199
    %p202 = scmp.ne.s32.totalorder %s187, %s201
    %p203 = scmp.eq.s32.totalorder %s24, 0
    %p204 = por %p202, %p203
    %s206 = sadd.s32 %s205, 1
    %p209 = scmp.eq.s32.totalorder %s18, 7
    %p210 = scmp.ne.s32.totalorder %s205, %s207
    %p211 = scmp.eq.s32.totalorder %s18, 0
    %p212 = por %p210, %p211
    %p213 = scmp.ne.s32.totalorder %s205, %s207
    %p214 = scmp.eq.s32.totalorder %s23, 7
    %p215 = por %p213, %p214
    %p216 = scmp.ne.s32.totalorder %s207, %s208
    %p217 = scmp.eq.s32.totalorder %s23, 0
    %p218 = por %p216, %p217
    %p219 = scmp.ne.s32.totalorder %s207, %s208
    %p220 = scmp.eq.s32.totalorder %s24, 7
    %p221 = por %p219, %p220
    %p223 = scmp.ne.s32.totalorder %s208, %s222
    %p224 = scmp.eq.s32.totalorder %s24, 0
    %p225 = por %p223, %p224
    %s227 = sadd.s32 %s226, 1
    %p230 = scmp.eq.s32.totalorder %s18, 7
    %p231 = scmp.ne.s32.totalorder %s226, %s228
    %p232 = scmp.eq.s32.totalorder %s18, 0
    %p233 = por %p231, %p232
    %p234 = scmp.ne.s32.totalorder %s226, %s228
    %p235 = scmp.eq.s32.totalorder %s23, 7
    %p236 = por %p234, %p235
    %p237 = scmp.ne.s32.totalorder %s228, %s229
    %p238 = scmp.eq.s32.totalorder %s23, 0
    %p239 = por %p237, %p238
    %p240 = scmp.ne.s32.totalorder %s228, %s229
    %p241 = scmp.eq.s32.totalorder %s24, 7
    %p242 = por %p240, %p241
    %p244 = scmp.ne.s32.totalorder %s229, %s243
    %p245 = scmp.eq.s32.totalorder %s24, 0
    %p246 = por %p244, %p245
    %s248 = sadd.s32 %s247, 1
    %p251 = scmp.eq.s32.totalorder %s18, 7
    %p252 = scmp.ne.s32.totalorder %s247, %s249
    %p253 = scmp.eq.s32.totalorder %s18, 0
    %p254 = por %p252, %p253
    %p255 = scmp.ne.s32.totalorder %s247, %s249
    %p256 = scmp.eq.s32.totalorder %s23, 7
    %p257 = por %p255, %p256
    %p258 = scmp.ne.s32.totalorder %s249, %s250
    %p259 = scmp.eq.s32.totalorder %s23, 0
    %p260 = por %p258, %p259
    %p261 = scmp.ne.s32.totalorder %s249, %s250
    %p262 = scmp.eq.s32.totalorder %s24, 7
    %p263 = por %p261, %p262
    %p265 = scmp.ne.s32.totalorder %s250, %s264
    %p266 = scmp.eq.s32.totalorder %s24, 0
    %p267 = por %p265, %p266
    %s269 = sadd.s32 %s268, 1
    %p272 = scmp.eq.s32.totalorder %s18, 7
    %p273 = scmp.ne.s32.totalorder %s268, %s270
    %p274 = scmp.eq.s32.totalorder %s18, 0
    %p275 = por %p273, %p274
    %p276 = scmp.ne.s32.totalorder %s268, %s270
    %p277 = scmp.eq.s32.totalorder %s23, 7
    %p278 = por %p276, %p277
    %p279 = scmp.ne.s32.totalorder %s270, %s271
    %p280 = scmp.eq.s32.totalorder %s23, 0
    %p281 = por %p279, %p280
    %p282 = scmp.ne.s32.totalorder %s270, %s271
    %p283 = scmp.eq.s32.totalorder %s24, 7
    %p284 = por %p282, %p283
    %p286 = scmp.ne.s32.totalorder %s271, %s285
    %p287 = scmp.eq.s32.totalorder %s24, 0
    %p288 = por %p286, %p287
    %s290 = sadd.s32 %s289, 1
    %p293 = scmp.eq.s32.totalorder %s18, 7
    %p294 = scmp.ne.s32.totalorder %s289, %s291
    %p295 = scmp.eq.s32.totalorder %s18, 0
    %p296 = por %p294, %p295
    %p297 = scmp.ne.s32.totalorder %s289, %s291
    %p298 = scmp.eq.s32.totalorder %s23, 7
    %p299 = por %p297, %p298
    %p300 = scmp.ne.s32.totalorder %s291, %s292
    %p301 = scmp.eq.s32.totalorder %s23, 0
    %p302 = por %p300, %p301
    %p303 = scmp.ne.s32.totalorder %s291, %s292
    %p304 = scmp.eq.s32.totalorder %s24, 7
    %p305 = por %p303, %p304
    %p307 = scmp.ne.s32.totalorder %s292, %s306
    %p308 = scmp.eq.s32.totalorder %s24, 0
    %p309 = por %p307, %p308
    %s310 = ssub.s32 %s25, %s37
    %s311 = ssub.s32 %s26, %s33
    %s312 = sor.u32 %s310, %s311
    %p313 = scmp.eq.s32.totalorder %s312, 0
    %s315 = sadd.s32 %s314, 1
    %s316 = scalar_select %p313, %s314, %s315
    %p319 = pneg %p313
    %p320 = scmp.eq.s32.totalorder %s18, 7
    %p321 = por %p319, %p320
    %p322 = scmp.ne.s32.totalorder %s314, %s317
    %p323 = scmp.eq.s32.totalorder %s18, 0
    %p324 = por %p322, %p323
    %p325 = scmp.ne.s32.totalorder %s314, %s317
    %p326 = scmp.eq.s32.totalorder %s23, 7
    %p327 = por %p325, %p326
    %p328 = scmp.ne.s32.totalorder %s317, %s318
    %p329 = scmp.eq.s32.totalorder %s23, 0
    %p330 = por %p328, %p329
    %p331 = scmp.ne.s32.totalorder %s317, %s318
    %p332 = scmp.eq.s32.totalorder %s24, 7
    %p333 = por %p331, %p332
    %p335 = scmp.ne.s32.totalorder %s318, %s334
    %p336 = scmp.eq.s32.totalorder %s24, 0
    %p337 = por %p335, %p336
    %p338 = scmp.le.s32.totalorder 1, %s18
    %p339 = scmp.lt.s32.totalorder %s18, 9
    %p340 = pnand %p338, %p339
    %p341 = pneg %p340
    // Predicated region
    $region9: #{tpu_custom_call.1} parent=5 // pred_check
      _
    $region10: #{tpu_custom_call.1} parent=5 // pred_check_branch
      %343 = sbr.rel (%p340) target = $region12
    $region11: #{tpu_custom_call.1} parent=5 // pred_region
      %s344 = ssub.s32 %s18, 1
      // Predicated region
      $region13: #{tpu_custom_call.1} parent=11 // pred_check
        %p345 = pneg %p155
      $region14: #{tpu_custom_call.1} parent=11 // pred_check_branch
        %347 = sbr.rel (%p345) target = $region16
      $region15: #{tpu_custom_call.1} parent=11 // pred_region
        _
      $region16: #{tpu_custom_call.1} parent=11 // pred_fallthru
        _
      // Predicated region
      $region17: #{tpu_custom_call.1} parent=11 // pred_check
        %p348 = pneg %p176
      $region18: #{tpu_custom_call.1} parent=11 // pred_check_branch
        %350 = sbr.rel (%p348) target = $region20
      $region19: #{tpu_custom_call.1} parent=11 // pred_region
        _
      $region20: #{tpu_custom_call.1} parent=11 // pred_fallthru
        _
      // Predicated region
      $region21: #{tpu_custom_call.1} parent=11 // pred_check
        %p351 = pneg %p197
      $region22: #{tpu_custom_call.1} parent=11 // pred_check_branch
        %353 = sbr.rel (%p351) target = $region24
      $region23: #{tpu_custom_call.1} parent=11 // pred_region
        _
      $region24: #{tpu_custom_call.1} parent=11 // pred_fallthru
        _
      // Predicated region
      $region25: #{tpu_custom_call.1} parent=11 // pred_check
        %p354 = pneg %p218
      $region26: #{tpu_custom_call.1} parent=11 // pred_check_branch
        %356 = sbr.rel (%p354) target = $region28
      $region27: #{tpu_custom_call.1} parent=11 // pred_region
        _
      $region28: #{tpu_custom_call.1} parent=11 // pred_fallthru
        _
      // Predicated region
      $region29: #{tpu_custom_call.1} parent=11 // pred_check
        %p357 = pneg %p239
      $region30: #{tpu_custom_call.1} parent=11 // pred_check_branch
        %359 = sbr.rel (%p357) target = $region32
      $region31: #{tpu_custom_call.1} parent=11 // pred_region
        _
      $region32: #{tpu_custom_call.1} parent=11 // pred_fallthru
        _
      // Predicated region
      $region33: #{tpu_custom_call.1} parent=11 // pred_check
        %p360 = pneg %p260
      $region34: #{tpu_custom_call.1} parent=11 // pred_check_branch
        %362 = sbr.rel (%p360) target = $region36
      $region35: #{tpu_custom_call.1} parent=11 // pred_region
        _
      $region36: #{tpu_custom_call.1} parent=11 // pred_fallthru
        _
      // Predicated region
      $region37: #{tpu_custom_call.1} parent=11 // pred_check
        %p363 = pneg %p281
      $region38: #{tpu_custom_call.1} parent=11 // pred_check_branch
        %365 = sbr.rel (%p363) target = $region40
      $region39: #{tpu_custom_call.1} parent=11 // pred_region
        _
      $region40: #{tpu_custom_call.1} parent=11 // pred_fallthru
        _
      // Predicated region
      $region41: #{tpu_custom_call.1} parent=11 // pred_check
        %p366 = pneg %p302
      $region42: #{tpu_custom_call.1} parent=11 // pred_check_branch
        %368 = sbr.rel (%p366) target = $region44
      $region43: #{tpu_custom_call.1} parent=11 // pred_region
        _
      $region44: #{tpu_custom_call.1} parent=11 // pred_fallthru
        _
    $region12: #{tpu_custom_call.1} parent=5 // pred_fallthru
      _
    %p369 = scmp.lt.s32.totalorder %s18, 8
    // Predicated region
    $region45: #{tpu_custom_call.1} parent=5 // pred_check
      %p370 = pneg %p369
    $region46: #{tpu_custom_call.1} parent=5 // pred_check_branch
      %372 = sbr.rel (%p370) target = $region48
    $region47: #{tpu_custom_call.1} parent=5 // pred_region
      // Predicated region
      $region49: #{tpu_custom_call.1} parent=47 // pred_check
        %p373 = pneg %p50
      $region50: #{tpu_custom_call.1} parent=47 // pred_check_branch
        %375 = sbr.rel (%p373) target = $region52
      $region51: #{tpu_custom_call.1} parent=47 // pred_region
        %p376 = scmp.lt.s32.totalorder %s25, 1
        %s377 = scalar_select %p376, %s25, 1
        %s378 = smul.addr %s377, 22
        %s379 = smul.addr %s378, 8
        %s380 = scalar_lea.vmem %s0, %s379
      $region52: #{tpu_custom_call.1} parent=47 // pred_fallthru
        _
      // Predicated region
      $region53: #{tpu_custom_call.1} parent=47 // pred_check
        %p381 = pneg %p76
      $region54: #{tpu_custom_call.1} parent=47 // pred_check_branch
        %383 = sbr.rel (%p381) target = $region56
      $region55: #{tpu_custom_call.1} parent=47 // pred_region
        %p384 = scmp.lt.s32.totalorder %s25, 1
        %s385 = scalar_select %p384, %s25, 1
        %s386 = smul.addr %s385, 22
        %s387 = smul.addr %s386, 8
        %s388 = scalar_lea.vmem %s1, %s387
      $region56: #{tpu_custom_call.1} parent=47 // pred_fallthru
        _
      // Predicated region
      $region57: #{tpu_custom_call.1} parent=47 // pred_check
        %p389 = pneg %p102
      $region58: #{tpu_custom_call.1} parent=47 // pred_check_branch
        %391 = sbr.rel (%p389) target = $region60
      $region59: #{tpu_custom_call.1} parent=47 // pred_region
        %p392 = scmp.lt.s32.totalorder %s25, 1
        %s393 = scalar_select %p392, %s25, 1
        %s394 = smul.addr %s393, 20
        %s395 = smul.addr %s394, 8
        %s396 = scalar_lea.vmem %s2, %s395
      $region60: #{tpu_custom_call.1} parent=47 // pred_fallthru
        _
      // Predicated region
      $region61: #{tpu_custom_call.1} parent=47 // pred_check
        %p397 = pneg %p128
      $region62: #{tpu_custom_call.1} parent=47 // pred_check_branch
        %399 = sbr.rel (%p397) target = $region64
      $region63: #{tpu_custom_call.1} parent=47 // pred_region
        %p400 = scmp.lt.s32.totalorder %s25, 1
        %s401 = scalar_select %p400, %s25, 1
        %s402 = smul.addr %s401, 20
        %s403 = smul.addr %s402, 8
        %s404 = scalar_lea.vmem %s3, %s403
      $region64: #{tpu_custom_call.1} parent=47 // pred_fallthru
        _
    $region48: #{tpu_custom_call.1} parent=5 // pred_fallthru
      _
    %p405 = scmp.le.s32.totalorder 1, %s18
    %p406 = scmp.lt.s32.totalorder %s18, 9
    %p407 = pnand %p405, %p406
    %p408 = pneg %p407
    // Predicated region
    $region65: #{tpu_custom_call.1} parent=5 // pred_check
      _
    $region66: #{tpu_custom_call.1} parent=5 // pred_check_branch
      %410 = sbr.rel (%p407) target = $region68
    $region67: #{tpu_custom_call.1} parent=5 // pred_region
      %s411 = ssub.s32 %s18, 1
      %p412 = scmp.lt.s32.totalorder %s27, 1
      %s413 = scalar_select %p412, %s27, 1
      %s414 = smul.addr %s413, 22
      %s415 = smul.addr %s414, 8
      %s416 = scalar_lea.vmem %s0, %s415
      %p417 = pneg %p56
      %p418 = pneg %p53
      %p419 = scmp.lt.s32.totalorder %s27, 1
      %s420 = scalar_select %p419, %s27, 1
      %s421 = smul.addr %s420, 22
      %s422 = smul.addr %s421, 8
      %s423 = scalar_lea.vmem %s1, %s422
      %p424 = pneg %p82
      %p425 = pneg %p79
      %p426 = scmp.lt.s32.totalorder %s27, 1
      %s427 = scalar_select %p426, %s27, 1
      %s428 = smul.addr %s427, 20
      %s429 = smul.addr %s428, 8
      %s430 = scalar_lea.vmem %s2, %s429
      %p431 = pneg %p108
      %p432 = pneg %p105
      %p433 = scmp.lt.s32.totalorder %s27, 1
      %s434 = scalar_select %p433, %s27, 1
      %s435 = smul.addr %s434, 20
      %s436 = smul.addr %s435, 8
      %s437 = scalar_lea.vmem %s3, %s436
      %p438 = pneg %p134
      %p439 = pneg %p131
      %p440 = pneg %p155
      %p441 = pneg %p152
      %p442 = pneg %p176
      %p443 = pneg %p173
      %p444 = pneg %p197
      %p445 = pneg %p194
      %p446 = pneg %p218
      %p447 = pneg %p215
      %p448 = pneg %p239
      %p449 = pneg %p236
      %p450 = pneg %p260
      %p451 = pneg %p257
      %p452 = pneg %p281
      %p453 = pneg %p278
      %p454 = pneg %p302
      %p455 = pneg %p299
      %p456 = pneg %p330
      %p457 = pneg %p327
      %s458 = smul.u32 2, %s28
      %p459 = scmp.lt.s32.totalorder %s27, 1
      %s460 = scalar_select %p459, %s27, 1
      %p461 = scmp.lt.s32.totalorder %s458, 7
      %s462 = scalar_select %p461, %s458, 7
      %s463 = smul.addr %s460, 8
      %s464 = sadd.s32 %s462, %s463
      %s465 = smul.addr %s464, 8
      %s466 = scalar_lea.vmem %s12, %s465
      %p467 = scmp.lt.s32.totalorder %s27, 1
      %s468 = scalar_select %p467, %s27, 1
      %s469 = smul.addr %s468, 22
      %s470 = smul.addr %s469, 8
      %s471 = scalar_lea.vmem %s0, %s470
      %p472 = scmp.lt.s32.totalorder %s27, 1
      %s473 = scalar_select %p472, %s27, 1
      %s474 = smul.addr %s473, 22
      %s475 = smul.addr %s474, 8
      %s476 = scalar_lea.vmem %s1, %s475
      %p477 = scmp.lt.s32.totalorder %s27, 1
      %s478 = scalar_select %p477, %s27, 1
      %s479 = smul.addr %s478, 20
      %s480 = smul.addr %s479, 8
      %s481 = scalar_lea.vmem %s2, %s480
      %p482 = scmp.lt.s32.totalorder %s27, 1
      %s483 = scalar_select %p482, %s27, 1
      %s484 = smul.addr %s483, 20
      %s485 = smul.addr %s484, 8
      %s486 = scalar_lea.vmem %s3, %s485
      %s487 = smul.u32 2, %s28
      %p488 = scmp.lt.s32.totalorder %s27, 1
      %s489 = scalar_select %p488, %s27, 1
      %p490 = scmp.lt.s32.totalorder %s487, 7
      %s491 = scalar_select %p490, %s487, 7
      %s492 = smul.addr %s489, 8
      %s493 = sadd.s32 %s491, %s492
      %s494 = smul.addr %s493, 8
      %s495 = scalar_lea.vmem %s12, %s494
      %s496 = smul.u32 2, %s28
      %s497 = smul.u32 %s28, 2
      %s498 = smul.u32 %s497, 16
      %s499 = scalar_lea.vmem %s471, %s498
      %v500 = vld [vmem:[%s499] sm:$0xff]
      %v501 = vld [vmem:[%s499 + $0x8] sm:$0x1]
      %v502 = vld [vmem:[%s499 + $0x10] sm:$0xff]
      %v503 = vld [vmem:[%s499 + $0x18] sm:$0x1]
      %v504 = vld [vmem:[%s499 + $0x20] sm:$0xff]
      %v505 = vld [vmem:[%s499 + $0x28] sm:$0x1]
      %v506 = vld [vmem:[%s499 + $0x30] sm:$0xff]
      %v507 = vld [vmem:[%s499 + $0x38] sm:$0x1]
      %v508 = vld [vmem:[%s499 + $0x40] sm:$0xff]
      %v509 = vld [vmem:[%s499 + $0x48] sm:$0x1]
      %s510 = scalar_lea.vmem %s476, %s498
      %v511 = vld [vmem:[%s510] sm:$0xff]
      %v512 = vld [vmem:[%s510 + $0x10] sm:$0xff]
      %v513 = vld [vmem:[%s510 + $0x20] sm:$0xff]
      %v514 = vld [vmem:[%s510 + $0x30] sm:$0xff]
      %v515 = vld [vmem:[%s510 + $0x40] sm:$0xff]
      %s516 = scalar_lea.vmem %s481, %s498
      %v517 = vld [vmem:[%s516] sm:$0xff]
      %v518 = vld [vmem:[%s516 + $0x8] sm:$0x1]
      %v519 = vld [vmem:[%s516 + $0x10] sm:$0xff]
      %v520 = vld [vmem:[%s516 + $0x18] sm:$0x1]
      %v521 = vld [vmem:[%s516 + $0x20] sm:$0xff]
      %v522 = vld [vmem:[%s516 + $0x28] sm:$0x1]
      %v523 = vld [vmem:[%s516 + $0x30] sm:$0xff]
      %v524 = vld [vmem:[%s516 + $0x38] sm:$0x1]
      %s525 = scalar_lea.vmem %s486, %s498
      %v526 = vld [vmem:[%s525] sm:$0xff]
      %v527 = vld [vmem:[%s525 + $0x10] sm:$0xff]
      %v528 = vld [vmem:[%s525 + $0x20] sm:$0xff]
      %v529 = vld [vmem:[%s525 + $0x30] sm:$0xff]
      %534 = vrot.lane.b32.xlu0 %v511, 4
      %v535 = vpop.permute.xlu0 %534
      %536 = vrot.lane.b32.xlu0 %v512, 4
      %v537 = vpop.permute.xlu0 %536
      %538 = vrot.lane.b32.xlu0 %v513, 4
      %v539 = vpop.permute.xlu0 %538
      %540 = vrot.lane.b32.xlu0 %v514, 4
      %v541 = vpop.permute.xlu0 %540
      %vm554 = vcmask 1046528
      %v555 = vrot.slane %v500, 1
      %v556 = vrot.slane %v501, 1
      %v557 = vsel %vm554, %v555, %v556
      %v558 = vrot.slane %v502, 1
      %v559 = vrot.slane %v503, 1
      %v560 = vsel %vm554, %v558, %v559
      %v561 = vrot.slane %v504, 1
      %v562 = vrot.slane %v505, 1
      %v563 = vsel %vm554, %v561, %v562
      %v564 = vrot.slane %v506, 1
      %v565 = vrot.slane %v507, 1
      %v566 = vsel %vm554, %v564, %v565
      %567 = vrot.lane.b32.xlu0 %v557, 8
      %v568 = vpop.permute.xlu0 %567
      %569 = vrot.lane.b32.xlu0 %v560, 8
      %v570 = vpop.permute.xlu0 %569
      %571 = vrot.lane.b32.xlu0 %v563, 8
      %v572 = vpop.permute.xlu0 %571
      %573 = vrot.lane.b32.xlu0 %v566, 8
      %v574 = vpop.permute.xlu0 %573
      %583 = vrot.lane.b32.xlu0 %v517, 12
      %v584 = vpop.permute.xlu0 %583
      %585 = vrot.lane.b32.xlu0 %v519, 12
      %v586 = vpop.permute.xlu0 %585
      %587 = vrot.lane.b32.xlu0 %v521, 12
      %v588 = vpop.permute.xlu0 %587
      %589 = vrot.lane.b32.xlu0 %v523, 12
      %v590 = vpop.permute.xlu0 %589
      %599 = vrot.lane.b32.xlu0 %v526, 16
      %v600 = vpop.permute.xlu0 %599
      %601 = vrot.lane.b32.xlu0 %v527, 16
      %v602 = vpop.permute.xlu0 %601
      %603 = vrot.lane.b32.xlu0 %v528, 16
      %v604 = vpop.permute.xlu0 %603
      %605 = vrot.lane.b32.xlu0 %v529, 16
      %v606 = vpop.permute.xlu0 %605
      %v615 = vrot.slane %v517, 1
      %v616 = vrot.slane %v518, 1
      %v617 = vsel %vm554, %v615, %v616
      %v618 = vrot.slane %v519, 1
      %v619 = vrot.slane %v520, 1
      %v620 = vsel %vm554, %v618, %v619
      %v621 = vrot.slane %v521, 1
      %v622 = vrot.slane %v522, 1
      %v623 = vsel %vm554, %v621, %v622
      %v624 = vrot.slane %v523, 1
      %v625 = vrot.slane %v524, 1
      %v626 = vsel %vm554, %v624, %v625
      %627 = vrot.lane.b32.xlu0 %v617, 20
      %v628 = vpop.permute.xlu0 %627
      %629 = vrot.lane.b32.xlu0 %v620, 20
      %v630 = vpop.permute.xlu0 %629
      %631 = vrot.lane.b32.xlu0 %v623, 20
      %v632 = vpop.permute.xlu0 %631
      %633 = vrot.lane.b32.xlu0 %v626, 20
      %v634 = vpop.permute.xlu0 %633
      %640 = vrot.lane.b32.xlu0 %v502, 24
      %v641 = vpop.permute.xlu0 %640
      %642 = vrot.lane.b32.xlu0 %v504, 24
      %v643 = vpop.permute.xlu0 %642
      %644 = vrot.lane.b32.xlu0 %v506, 24
      %v645 = vpop.permute.xlu0 %644
      %646 = vrot.lane.b32.xlu0 %v508, 24
      %v647 = vpop.permute.xlu0 %646
      %653 = vrot.lane.b32.xlu0 %v512, 28
      %v654 = vpop.permute.xlu0 %653
      %655 = vrot.lane.b32.xlu0 %v513, 28
      %v656 = vpop.permute.xlu0 %655
      %657 = vrot.lane.b32.xlu0 %v514, 28
      %v658 = vpop.permute.xlu0 %657
      %659 = vrot.lane.b32.xlu0 %v515, 28
      %v660 = vpop.permute.xlu0 %659
      %v666 = vrot.slane %v508, 1
      %v667 = vrot.slane %v509, 1
      %v668 = vsel %vm554, %v666, %v667
      %669 = vrot.lane.b32.xlu0 %v560, 32
      %v670 = vpop.permute.xlu0 %669
      %671 = vrot.lane.b32.xlu0 %v563, 32
      %v672 = vpop.permute.xlu0 %671
      %673 = vrot.lane.b32.xlu0 %v566, 32
      %v674 = vpop.permute.xlu0 %673
      %675 = vrot.lane.b32.xlu0 %v668, 32
      %v676 = vpop.permute.xlu0 %675
      %vm681 = vcmask 31744
      %v682 = vsel %vm681, %v500, %v535
      %v683 = vsel %vm681, %v502, %v537
      %v684 = vsel %vm681, %v504, %v539
      %v685 = vsel %vm681, %v506, %v541
      %vm686 = vcmask 64512
      %v687 = vsel %vm686, %v682, %v568
      %v688 = vsel %vm686, %v683, %v570
      %v689 = vsel %vm686, %v684, %v572
      %v690 = vsel %vm686, %v685, %v574
      %vm691 = vcmask 97280
      %v692 = vsel %vm691, %v687, %v584
      %v693 = vsel %vm691, %v688, %v586
      %v694 = vsel %vm691, %v689, %v588
      %v695 = vsel %vm691, %v690, %v590
      %vm696 = vcmask 130048
      %v697 = vsel %vm696, %v692, %v600
      %v698 = vsel %vm696, %v693, %v602
      %v699 = vsel %vm696, %v694, %v604
      %v700 = vsel %vm696, %v695, %v606
      %vm701 = vcmask 162816
      %v702 = vsel %vm701, %v697, %v628
      %v703 = vsel %vm701, %v698, %v630
      %v704 = vsel %vm701, %v699, %v632
      %v705 = vsel %vm701, %v700, %v634
      %vm706 = vcmask 195584
      %v707 = vsel %vm706, %v702, %v641
      %v708 = vsel %vm706, %v703, %v643
      %v709 = vsel %vm706, %v704, %v645
      %v710 = vsel %vm706, %v705, %v647
      %vm711 = vcmask 228352
      %v712 = vsel %vm711, %v707, %v654
      %v713 = vsel %vm711, %v708, %v656
      %v714 = vsel %vm711, %v709, %v658
      %v715 = vsel %vm711, %v710, %v660
      %vm716 = vcmask 261120
      %v717 = vsel %vm716, %v712, %v670
      %v718 = vsel %vm716, %v713, %v672
      %v719 = vsel %vm716, %v714, %v674
      %v720 = vsel %vm716, %v715, %v676
      %v721 = vld [vmem:[%s4] sm:$0xff]
      %v722 = vld [vmem:[%s4 + $0x8] sm:$0xff]
      %v723 = vld [vmem:[%s4 + $0x10] sm:$0xff]
      %v724 = vld [vmem:[%s4 + $0x18] sm:$0xff]
      %v725 = vld [vmem:[%s4 + $0x20] sm:$0xf]
      %v726 = vld [vmem:[%s5] sm:$0x1]
      %v728 = vlaneseq
      %v729 = vshrl.u32 %v728, 7
      %v730 = vsub.s32 0, %v729
      %v731 = vrot.slane %v726, %v730
      %vm733 = vcmask 293888
      %v735 = vsel %vm733, %v717, 0
      %v738 = vsel %vm733, %v718, 0
      %v741 = vsel %vm733, %v719, 0
      %v744 = vsel %vm733, %v720, 0
      %vm746 = vcmask 1043456
      %v748 = vsel %vm746, %v725, 0
      %750 = vmatprep.subr.mxu0 0.0
      %751 = vmatpush1.msra.mxu0 %v721
      %752 = vmatprep.subr.mxu0 0.0
      %753 = vmatpush1.msra.mxu0 %v722
      %754 = vmatprep.subr.mxu0 0.0
      %755 = vmatpush1.msra.mxu0 %v723
      %756 = vmatprep.subr.mxu0 0.0
      %757 = vmatpush1.msra.mxu0 %v724
      %758 = vmatprep.subr.mxu0 0.0
      %759 = vmatpush1.msra.mxu0 %v748
      %760 = vmatprep.subr.mxu0 0.0
      %761 = vmatpush1.msra.mxu0 0.0
      %762 = vmatprep.subr.mxu0 0.0
      %763 = vmatpush1.msra.mxu0 0.0
      %764 = vmatprep.subr.mxu0 0.0
      %765 = vmatpush1.msra.mxu0 0.0
      %766 = vmatprep.subr.mxu0 0.0
      %767 = vmatpush1.msra.mxu0 0.0
      %768 = vmatprep.subr.mxu0 0.0
      %769 = vmatpush1.msra.mxu0 0.0
      %770 = vmatprep.subr.mxu0 0.0
      %771 = vmatpush1.msra.mxu0 0.0
      %772 = vmatprep.subr.mxu0 0.0
      %773 = vmatpush1.msra.mxu0 0.0
      %774 = vmatprep.subr.mxu0 0.0
      %775 = vmatpush1.msra.mxu0 0.0
      %776 = vmatprep.subr.mxu0 0.0
      %777 = vmatpush1.msra.mxu0 0.0
      %778 = vmatprep.subr.mxu0 0.0
      %779 = vmatpush1.msra.mxu0 0.0
      %780 = vmatprep.subr.mxu0 0.0
      %781 = vmatpush1.msra.mxu0 0.0
      %782 = vmatprep.subr.mxu0 0.0
      %783 = vmatpush1.msra.mxu0 0.0
      %784 = vmatprep.subr.mxu0 0.0
      %785 = vmatpush1.msra.mxu0 0.0
      %786 = vmatprep.subr.mxu0 0.0
      %787 = vmatpush1.msra.mxu0 0.0
      %788 = vmatprep.subr.mxu0 0.0
      %789 = vmatpush1.msra.mxu0 0.0
      %790 = vmatprep.subr.mxu0 0.0
      %791 = vmatpush1.msra.mxu0 0.0
      %792 = vmatprep.subr.mxu0 0.0
      %793 = vmatpush1.msra.mxu0 0.0
      %794 = vmatprep.subr.mxu0 0.0
      %795 = vmatpush1.msra.mxu0 0.0
      %796 = vmatprep.subr.mxu0 0.0
      %797 = vmatpush1.msra.mxu0 0.0
      %798 = vmatprep.subr.mxu0 0.0
      %799 = vmatpush1.msra.mxu0 0.0
      %800 = vmatprep.subr.mxu0 0.0
      %801 = vmatpush1.msra.mxu0 0.0
      %802 = vmatprep.subr.mxu0 0.0
      %803 = vmatpush1.msra.mxu0 0.0
      %804 = vmatprep.subr.mxu0 0.0
      %805 = vmatpush1.msra.mxu0 0.0
      %806 = vmatprep.subr.mxu0 0.0
      %807 = vmatpush1.msra.mxu0 0.0
      %808 = vmatprep.subr.mxu0 0.0
      %809 = vmatpush1.msra.mxu0 0.0
      %810 = vmatprep.subr.mxu0 0.0
      %811 = vmatpush1.msra.mxu0 0.0
      %812 = vmatprep.subr.mxu0 0.0
      %813 = vmatpush1.msra.mxu0 0.0
      %814 = vmatprep.mubr.f32.mxu0 0.0
      %815 = vmatmul.mubr.f32.gmra.mrb[0].mxu0 %v735
      %v816 = vpop.f32.mrb[0].mxu0
      %v817 = vadd.f32 %v731, %v816
      %v818 = vpop.f32.mrb[0].mxu0
      %819 = vmatprep.mubr.f32.mxu0 0.0
      %820 = vmatmul.mubr.f32.gmra.mrb[0].mxu0 %v738
      %v821 = vpop.f32.mrb[0].mxu0
      %v822 = vadd.f32 %v731, %v821
      %v823 = vpop.f32.mrb[0].mxu0
      %824 = vmatprep.mubr.f32.mxu0 0.0
      %825 = vmatmul.mubr.f32.gmra.mrb[0].mxu0 %v741
      %v826 = vpop.f32.mrb[0].mxu0
      %v827 = vadd.f32 %v731, %v826
      %v828 = vpop.f32.mrb[0].mxu0
      %829 = vmatprep.mubr.f32.mxu0 0.0
      %830 = vmatmul.mubr.f32.gmra.mrb[0].mxu0 %v744
      %v831 = vpop.f32.mrb[0].mxu0
      %v832 = vadd.f32 %v731, %v831
      %v833 = vpop.f32.mrb[0].mxu0
      %834 = vdwg.mxu0
      %vm835 = vcmp.ge.f32.partialorder %v817, 0.0
      %vm836 = vcmp.ge.f32.partialorder %v822, 0.0
      %vm837 = vcmp.ge.f32.partialorder %v827, 0.0
      %vm838 = vcmp.ge.f32.partialorder %v832, 0.0
      %v839 = vmul.f32 %v817, 0.01
      %v840 = vmul.f32 %v822, 0.01
      %v841 = vmul.f32 %v827, 0.01
      %v842 = vmul.f32 %v832, 0.01
      %v843 = vsel %vm835, %v817, %v839
      %v844 = vsel %vm836, %v822, %v840
      %v845 = vsel %vm837, %v827, %v841
      %v846 = vsel %vm838, %v832, %v842
      %v847 = vlaneseq
      %v848 = vshrl.u32 %v847, 7
      %v849 = vadd.s32 %v848, 8
      %v850 = vadd.s32 %v848, 16
      %v851 = vadd.s32 %v848, 24
      %p852 = scmp.eq.s32.totalorder %s28, 0
      %vm853 = vcmp.lt.s32.totalorder %v848, 8
      %vm854 = vcmp.lt.s32.totalorder %v849, 8
      %vm855 = vcmp.lt.s32.totalorder %v850, 8
      %vm856 = vcmp.lt.s32.totalorder %v851, 8
      %s857 = scalar_select %p852, 1, 0
      %v858 = vstv %s857
      %vm859 = vcmp.eq.s32.totalorder %v858, 1
      %vm860 = vmand %vm859, %vm853
      %vm861 = vmand %vm859, %vm854
      %vm862 = vmand %vm859, %vm855
      %vm863 = vmand %vm859, %vm856
      %p864 = scmp.eq.s32.totalorder %s28, 3
      %vm865 = vcmp.ge.s32.totalorder %v848, 24
      %vm866 = vcmp.ge.s32.totalorder %v849, 24
      %vm867 = vcmp.ge.s32.totalorder %v850, 24
      %vm868 = vcmp.ge.s32.totalorder %v851, 24
      %s869 = scalar_select %p864, 1, 0
      %v870 = vstv %s869
      %vm871 = vcmp.eq.s32.totalorder %v870, 1
      %vm872 = vmand %vm871, %vm865
      %vm873 = vmand %vm871, %vm866
      %vm874 = vmand %vm871, %vm867
      %vm875 = vmand %vm871, %vm868
      %vm876 = vmor %vm860, %vm872
      %vm877 = vmor %vm861, %vm873
      %vm878 = vmor %vm862, %vm874
      %vm879 = vmor %vm863, %vm875
      %v880 = vsel %vm876, 0.0, %v843
      %v881 = vsel %vm877, 0.0, %v844
      %v882 = vsel %vm878, 0.0, %v845
      %v883 = vsel %vm879, 0.0, %v846
      %v888 = vrot.slane %v880, 7
      %v889 = vrot.slane %v881, 7
      %v890 = vrot.slane %v882, 7
      %v891 = vrot.slane %v883, 7
      %vm896 = vcmask 1040384
      %v897 = vsel %vm896, 0.0, %v888
      %v898 = vsel %vm896, 0.0, %v889
      %v899 = vsel %vm896, 0.0, %v890
      %v900 = vsel %vm896, 0.0, %v891
      %v901 = vrot.slane %v880, 1
      %v902 = vrot.slane %v881, 1
      %v903 = vrot.slane %v882, 1
      %v904 = vrot.slane %v883, 1
      %v909 = vsel %vm554, %v901, 0.0
      %v910 = vsel %vm554, %v902, 0.0
      %v911 = vsel %vm554, %v903, 0.0
      %v912 = vsel %vm554, %v904, 0.0
      %913 = vrot.lane.b32.xlu0 %v880, 8
      %v914 = vpop.permute.xlu0 %913
      %915 = vrot.lane.b32.xlu0 %v881, 8
      %v916 = vpop.permute.xlu0 %915
      %921 = vrot.lane.b32.xlu0 %v909, 16
      %v922 = vpop.permute.xlu0 %921
      %923 = vrot.lane.b32.xlu0 %v910, 16
      %v924 = vpop.permute.xlu0 %923
      %929 = vrot.lane.b32.xlu0 %v898, 24
      %v930 = vpop.permute.xlu0 %929
      %931 = vrot.lane.b32.xlu0 %v899, 24
      %v932 = vpop.permute.xlu0 %931
      %935 = vrot.lane.b32.xlu0 %v881, 32
      %v936 = vpop.permute.xlu0 %935
      %937 = vrot.lane.b32.xlu0 %v882, 32
      %v938 = vpop.permute.xlu0 %937
      %942 = vrot.lane.b32.xlu0 %v910, 40
      %v943 = vpop.permute.xlu0 %942
      %944 = vrot.lane.b32.xlu0 %v911, 40
      %v945 = vpop.permute.xlu0 %944
      %949 = vrot.lane.b32.xlu0 %v899, 48
      %v950 = vpop.permute.xlu0 %949
      %951 = vrot.lane.b32.xlu0 %v900, 48
      %v952 = vpop.permute.xlu0 %951
      %955 = vrot.lane.b32.xlu0 %v882, 56
      %v956 = vpop.permute.xlu0 %955
      %957 = vrot.lane.b32.xlu0 %v883, 56
      %v958 = vpop.permute.xlu0 %957
      %962 = vrot.lane.b32.xlu0 %v911, 64
      %v963 = vpop.permute.xlu0 %962
      %964 = vrot.lane.b32.xlu0 %v912, 64
      %v965 = vpop.permute.xlu0 %964
      %v968 = vsel %vm686, %v897, %v914
      %v969 = vsel %vm686, %v898, %v916
      %v970 = vsel %vm696, %v968, %v922
      %v971 = vsel %vm696, %v969, %v924
      %v972 = vsel %vm706, %v970, %v930
      %v973 = vsel %vm706, %v971, %v932
      %v974 = vsel %vm716, %v972, %v936
      %v975 = vsel %vm716, %v973, %v938
      %vm976 = vcmask 326656
      %v977 = vsel %vm976, %v974, %v943
      %v978 = vsel %vm976, %v975, %v945
      %vm979 = vcmask 392192
      %v980 = vsel %vm979, %v977, %v950
      %v981 = vsel %vm979, %v978, %v952
      %vm982 = vcmask 457728
      %v983 = vsel %vm982, %v980, %v956
      %v984 = vsel %vm982, %v981, %v958
      %vm985 = vcmask 523264
      %v986 = vsel %vm985, %v983, %v963
      %v987 = vsel %vm985, %v984, %v965
      %v988 = vld [vmem:[%s6] sm:$0xff]
      %v989 = vld [vmem:[%s6 + $0x8] sm:$0xff]
      %v990 = vld [vmem:[%s6 + $0x10] sm:$0xff]
      %v991 = vld [vmem:[%s6 + $0x18] sm:$0xff]
      %v992 = vld [vmem:[%s6 + $0x20] sm:$0xff]
      %v993 = vld [vmem:[%s6 + $0x28] sm:$0xff]
      %v994 = vld [vmem:[%s6 + $0x30] sm:$0xff]
      %v995 = vld [vmem:[%s6 + $0x38] sm:$0xff]
      %v996 = vld [vmem:[%s6 + $0x40] sm:$0xff]
      %v997 = vld [vmem:[%s7] sm:$0x1]
      %v999 = vlaneseq
      %v1000 = vshrl.u32 %v999, 7
      %v1001 = vsub.s32 0, %v1000
      %v1002 = vrot.slane %v997, %v1001
      %vm1004 = vcmask 588800
      %v1006 = vsel %vm1004, %v986, 0
      %v1009 = vsel %vm1004, %v987, 0
      %1011 = vmatprep.subr.mxu0 0.0
      %1012 = vmatpush1.msra.mxu0 %v988
      %1013 = vmatprep.subr.mxu0 0.0
      %1014 = vmatpush1.msra.mxu0 %v989
      %1015 = vmatprep.subr.mxu0 0.0
      %1016 = vmatpush1.msra.mxu0 %v990
      %1017 = vmatprep.subr.mxu0 0.0
      %1018 = vmatpush1.msra.mxu0 %v991
      %1019 = vmatprep.subr.mxu0 0.0
      %1020 = vmatpush1.msra.mxu0 %v992
      %1021 = vmatprep.subr.mxu0 0.0
      %1022 = vmatpush1.msra.mxu0 %v993
      %1023 = vmatprep.subr.mxu0 0.0
      %1024 = vmatpush1.msra.mxu0 %v994
      %1025 = vmatprep.subr.mxu0 0.0
      %1026 = vmatpush1.msra.mxu0 %v995
      %1027 = vmatprep.subr.mxu0 0.0
      %1028 = vmatpush1.msra.mxu0 %v996
      %1029 = vmatprep.subr.mxu0 0.0
      %1030 = vmatpush1.msra.mxu0 0.0
      %1031 = vmatprep.subr.mxu0 0.0
      %1032 = vmatpush1.msra.mxu0 0.0
      %1033 = vmatprep.subr.mxu0 0.0
      %1034 = vmatpush1.msra.mxu0 0.0
      %1035 = vmatprep.subr.mxu0 0.0
      %1036 = vmatpush1.msra.mxu0 0.0
      %1037 = vmatprep.subr.mxu0 0.0
      %1038 = vmatpush1.msra.mxu0 0.0
      %1039 = vmatprep.subr.mxu0 0.0
      %1040 = vmatpush1.msra.mxu0 0.0
      %1041 = vmatprep.subr.mxu0 0.0
      %1042 = vmatpush1.msra.mxu0 0.0
      %1043 = vmatprep.subr.mxu0 0.0
      %1044 = vmatpush1.msra.mxu0 0.0
      %1045 = vmatprep.subr.mxu0 0.0
      %1046 = vmatpush1.msra.mxu0 0.0
      %1047 = vmatprep.subr.mxu0 0.0
      %1048 = vmatpush1.msra.mxu0 0.0
      %1049 = vmatprep.subr.mxu0 0.0
      %1050 = vmatpush1.msra.mxu0 0.0
      %1051 = vmatprep.subr.mxu0 0.0
      %1052 = vmatpush1.msra.mxu0 0.0
      %1053 = vmatprep.subr.mxu0 0.0
      %1054 = vmatpush1.msra.mxu0 0.0
      %1055 = vmatprep.subr.mxu0 0.0
      %1056 = vmatpush1.msra.mxu0 0.0
      %1057 = vmatprep.subr.mxu0 0.0
      %1058 = vmatpush1.msra.mxu0 0.0
      %1059 = vmatprep.subr.mxu0 0.0
      %1060 = vmatpush1.msra.mxu0 0.0
      %1061 = vmatprep.subr.mxu0 0.0
      %1062 = vmatpush1.msra.mxu0 0.0
      %1063 = vmatprep.subr.mxu0 0.0
      %1064 = vmatpush1.msra.mxu0 0.0
      %1065 = vmatprep.subr.mxu0 0.0
      %1066 = vmatpush1.msra.mxu0 0.0
      %1067 = vmatprep.subr.mxu0 0.0
      %1068 = vmatpush1.msra.mxu0 0.0
      %1069 = vmatprep.subr.mxu0 0.0
      %1070 = vmatpush1.msra.mxu0 0.0
      %1071 = vmatprep.subr.mxu0 0.0
      %1072 = vmatpush1.msra.mxu0 0.0
      %1073 = vmatprep.subr.mxu0 0.0
      %1074 = vmatpush1.msra.mxu0 0.0
      %1075 = vmatprep.mubr.f32.mxu0 0.0
      %1076 = vmatmul.mubr.f32.gmra.mrb[0].mxu0 %v1006
      %v1077 = vpop.f32.mrb[0].mxu0
      %v1078 = vadd.f32 %v1002, %v1077
      %v1079 = vpop.f32.mrb[0].mxu0
      %1080 = vmatprep.mubr.f32.mxu0 0.0
      %1081 = vmatmul.mubr.f32.gmra.mrb[0].mxu0 %v1009
      %v1082 = vpop.f32.mrb[0].mxu0
      %v1083 = vadd.f32 %v1002, %v1082
      %v1084 = vpop.f32.mrb[0].mxu0
      %1085 = vdwg.mxu0
      %v1086 = vmul.f32 %v1078, %v1078
      %v1087 = vmul.f32 %v1083, %v1083
      %v1088 = vld [vmem:[%s8] sm:$0xff]
      %v1089 = vld [vmem:[%s9] sm:$0x1]
      %v1091 = vlaneseq
      %v1092 = vshrl.u32 %v1091, 7
      %v1093 = vsub.s32 0, %v1092
      %v1094 = vrot.slane %v1089, %v1093
      %v1097 = vsel %vm686, %v1086, 0
      %v1100 = vsel %vm686, %v1087, 0
      %1102 = vmatprep.subr.mxu0 0.0
      %1103 = vmatpush1.msra.mxu0 %v1088
      %1104 = vmatprep.subr.mxu0 0.0
      %1105 = vmatpush1.msra.mxu0 0.0
      %1106 = vmatprep.subr.mxu0 0.0
      %1107 = vmatpush1.msra.mxu0 0.0
      %1108 = vmatprep.subr.mxu0 0.0
      %1109 = vmatpush1.msra.mxu0 0.0
      %1110 = vmatprep.subr.mxu0 0.0
      %1111 = vmatpush1.msra.mxu0 0.0
      %1112 = vmatprep.subr.mxu0 0.0
      %1113 = vmatpush1.msra.mxu0 0.0
      %1114 = vmatprep.subr.mxu0 0.0
      %1115 = vmatpush1.msra.mxu0 0.0
      %1116 = vmatprep.subr.mxu0 0.0
      %1117 = vmatpush1.msra.mxu0 0.0
      %1118 = vmatprep.subr.mxu0 0.0
      %1119 = vmatpush1.msra.mxu0 0.0
      %1120 = vmatprep.subr.mxu0 0.0
      %1121 = vmatpush1.msra.mxu0 0.0
      %1122 = vmatprep.subr.mxu0 0.0
      %1123 = vmatpush1.msra.mxu0 0.0
      %1124 = vmatprep.subr.mxu0 0.0
      %1125 = vmatpush1.msra.mxu0 0.0
      %1126 = vmatprep.subr.mxu0 0.0
      %1127 = vmatpush1.msra.mxu0 0.0
      %1128 = vmatprep.subr.mxu0 0.0
      %1129 = vmatpush1.msra.mxu0 0.0
      %1130 = vmatprep.subr.mxu0 0.0
      %1131 = vmatpush1.msra.mxu0 0.0
      %1132 = vmatprep.subr.mxu0 0.0
      %1133 = vmatpush1.msra.mxu0 0.0
      %1134 = vmatprep.subr.mxu0 0.0
      %1135 = vmatpush1.msra.mxu0 0.0
      %1136 = vmatprep.subr.mxu0 0.0
      %1137 = vmatpush1.msra.mxu0 0.0
      %1138 = vmatprep.subr.mxu0 0.0
      %1139 = vmatpush1.msra.mxu0 0.0
      %1140 = vmatprep.subr.mxu0 0.0
      %1141 = vmatpush1.msra.mxu0 0.0
      %1142 = vmatprep.subr.mxu0 0.0
      %1143 = vmatpush1.msra.mxu0 0.0
      %1144 = vmatprep.subr.mxu0 0.0
      %1145 = vmatpush1.msra.mxu0 0.0
      %1146 = vmatprep.subr.mxu0 0.0
      %1147 = vmatpush1.msra.mxu0 0.0
      %1148 = vmatprep.subr.mxu0 0.0
      %1149 = vmatpush1.msra.mxu0 0.0
      %1150 = vmatprep.subr.mxu0 0.0
      %1151 = vmatpush1.msra.mxu0 0.0
      %1152 = vmatprep.subr.mxu0 0.0
      %1153 = vmatpush1.msra.mxu0 0.0
      %1154 = vmatprep.subr.mxu0 0.0
      %1155 = vmatpush1.msra.mxu0 0.0
      %1156 = vmatprep.subr.mxu0 0.0
      %1157 = vmatpush1.msra.mxu0 0.0
      %1158 = vmatprep.subr.mxu0 0.0
      %1159 = vmatpush1.msra.mxu0 0.0
      %1160 = vmatprep.subr.mxu0 0.0
      %1161 = vmatpush1.msra.mxu0 0.0
      %1162 = vmatprep.subr.mxu0 0.0
      %1163 = vmatpush1.msra.mxu0 0.0
      %1164 = vmatprep.subr.mxu0 0.0
      %1165 = vmatpush1.msra.mxu0 0.0
      %1166 = vmatprep.mubr.f32.mxu0 0.0
      %1167 = vmatmul.mubr.f32.gmra.mrb[0].mxu0 %v1097
      %v1168 = vpop.f32.mrb[0].mxu0
      %v1169 = vadd.f32 %v1094, %v1168
      %v1170 = vpop.f32.mrb[0].mxu0
      %1171 = vmatprep.mubr.f32.mxu0 0.0
      %1172 = vmatmul.mubr.f32.gmra.mrb[0].mxu0 %v1100
      %v1173 = vpop.f32.mrb[0].mxu0
      %v1174 = vadd.f32 %v1094, %v1173
      %v1175 = vpop.f32.mrb[0].mxu0
      %1176 = vdwg.mxu0
      %v1177 = vrsqrt.pop %v1169
      %v1178 = vrsqrt.pop %v1174
      %v1179 = vmul.f32 %v1078, %v1177
      %v1180 = vmul.f32 %v1083, %v1178
      %v1181 = vld [vmem:[%s10] sm:$0xf]
      %v1182 = vld [vmem:[%s11] sm:$0x1]
      %v1184 = vlaneseq
      %v1185 = vshrl.u32 %v1184, 7
      %v1186 = vsub.s32 0, %v1185
      %v1187 = vrot.slane %v1182, %v1186
      %v1189 = vsel %vm681, %v527, 0
      %v1191 = vsel %vm681, %v528, 0
      %v1194 = vsel %vm746, %v1181, 0
      %1196 = vmatprep.subr.mxu0 0.0
      %1197 = vmatpush1.msra.mxu0 %v1194
      %1198 = vmatprep.subr.mxu0 0.0
      %1199 = vmatpush1.msra.mxu0 0.0
      %1200 = vmatprep.subr.mxu0 0.0
      %1201 = vmatpush1.msra.mxu0 0.0
      %1202 = vmatprep.subr.mxu0 0.0
      %1203 = vmatpush1.msra.mxu0 0.0
      %1204 = vmatprep.subr.mxu0 0.0
      %1205 = vmatpush1.msra.mxu0 0.0
      %1206 = vmatprep.subr.mxu0 0.0
      %1207 = vmatpush1.msra.mxu0 0.0
      %1208 = vmatprep.subr.mxu0 0.0
      %1209 = vmatpush1.msra.mxu0 0.0
      %1210 = vmatprep.subr.mxu0 0.0
      %1211 = vmatpush1.msra.mxu0 0.0
      %1212 = vmatprep.subr.mxu0 0.0
      %1213 = vmatpush1.msra.mxu0 0.0
      %1214 = vmatprep.subr.mxu0 0.0
      %1215 = vmatpush1.msra.mxu0 0.0
      %1216 = vmatprep.subr.mxu0 0.0
      %1217 = vmatpush1.msra.mxu0 0.0
      %1218 = vmatprep.subr.mxu0 0.0
      %1219 = vmatpush1.msra.mxu0 0.0
      %1220 = vmatprep.subr.mxu0 0.0
      %1221 = vmatpush1.msra.mxu0 0.0
      %1222 = vmatprep.subr.mxu0 0.0
      %1223 = vmatpush1.msra.mxu0 0.0
      %1224 = vmatprep.subr.mxu0 0.0
      %1225 = vmatpush1.msra.mxu0 0.0
      %1226 = vmatprep.subr.mxu0 0.0
      %1227 = vmatpush1.msra.mxu0 0.0
      %1228 = vmatprep.subr.mxu0 0.0
      %1229 = vmatpush1.msra.mxu0 0.0
      %1230 = vmatprep.subr.mxu0 0.0
      %1231 = vmatpush1.msra.mxu0 0.0
      %1232 = vmatprep.subr.mxu0 0.0
      %1233 = vmatpush1.msra.mxu0 0.0
      %1234 = vmatprep.subr.mxu0 0.0
      %1235 = vmatpush1.msra.mxu0 0.0
      %1236 = vmatprep.subr.mxu0 0.0
      %1237 = vmatpush1.msra.mxu0 0.0
      %1238 = vmatprep.subr.mxu0 0.0
      %1239 = vmatpush1.msra.mxu0 0.0
      %1240 = vmatprep.subr.mxu0 0.0
      %1241 = vmatpush1.msra.mxu0 0.0
      %1242 = vmatprep.subr.mxu0 0.0
      %1243 = vmatpush1.msra.mxu0 0.0
      %1244 = vmatprep.subr.mxu0 0.0
      %1245 = vmatpush1.msra.mxu0 0.0
      %1246 = vmatprep.subr.mxu0 0.0
      %1247 = vmatpush1.msra.mxu0 0.0
      %1248 = vmatprep.subr.mxu0 0.0
      %1249 = vmatpush1.msra.mxu0 0.0
      %1250 = vmatprep.subr.mxu0 0.0
      %1251 = vmatpush1.msra.mxu0 0.0
      %1252 = vmatprep.subr.mxu0 0.0
      %1253 = vmatpush1.msra.mxu0 0.0
      %1254 = vmatprep.subr.mxu0 0.0
      %1255 = vmatpush1.msra.mxu0 0.0
      %1256 = vmatprep.subr.mxu0 0.0
      %1257 = vmatpush1.msra.mxu0 0.0
      %1258 = vmatprep.subr.mxu0 0.0
      %1259 = vmatpush1.msra.mxu0 0.0
      %1260 = vmatprep.mubr.f32.mxu0 0.0
      %1261 = vmatmul.mubr.f32.gmra.mrb[0].mxu0 %v1189
      %v1262 = vpop.f32.mrb[0].mxu0
      %v1263 = vadd.f32 %v1187, %v1262
      %v1264 = vpop.f32.mrb[0].mxu0
      %1265 = vmatprep.mubr.f32.mxu0 0.0
      %1266 = vmatmul.mubr.f32.gmra.mrb[0].mxu0 %v1191
      %v1267 = vpop.f32.mrb[0].mxu0
      %v1268 = vadd.f32 %v1187, %v1267
      %v1269 = vpop.f32.mrb[0].mxu0
      %1270 = vdwg.mxu0
      %v1271 = vadd.f32 %v1179, %v1263
      %v1272 = vadd.f32 %v1180, %v1268
      %1273 = vst.msk [vmem:[%s495] sm:$0xff] %vm686, %v1271
      %1274 = vst.msk [vmem:[%s495 + $0x8] sm:$0xff] %vm686, %v1272
      %s1275 = smul.u32 2, %s28
      %p1276 = scmp.lt.s32.totalorder %s27, 1
      %s1277 = scalar_select %p1276, %s27, 1
      %p1278 = scmp.lt.s32.totalorder %s1275, 7
      %s1279 = scalar_select %p1278, %s1275, 7
      %s1280 = smul.addr %s1277, 8
      %s1281 = sadd.s32 %s1279, %s1280
      %s1282 = smul.addr %s1281, 8
      %s1283 = scalar_lea.vmem %s12, %s1282
      // Predicated region
      $region69: #{tpu_custom_call.1} parent=67 // pred_check
        %p1284 = pneg %p327
      $region70: #{tpu_custom_call.1} parent=67 // pred_check_branch
        %1286 = sbr.rel (%p1284) target = $region72
      $region71: #{tpu_custom_call.1} parent=67 // pred_region
        %s1287 = smul.u32 2, %s28
      $region72: #{tpu_custom_call.1} parent=67 // pred_fallthru
        _
    $region68: #{tpu_custom_call.1} parent=5 // pred_fallthru
      _
    %p1288 = scmp.le.s32.totalorder 2, %s18
    // Predicated region
    $region73: #{tpu_custom_call.1} parent=5 // pred_check
      %p1289 = pneg %p1288
    $region74: #{tpu_custom_call.1} parent=5 // pred_check_branch
      %1291 = sbr.rel (%p1289) target = $region76
    $region75: #{tpu_custom_call.1} parent=5 // pred_region
      %s1292 = ssub.s32 %s18, 2
      // Predicated region
      $region77: #{tpu_custom_call.1} parent=75 // pred_check
        %p1293 = pneg %p333
      $region78: #{tpu_custom_call.1} parent=75 // pred_check_branch
        %1295 = sbr.rel (%p1293) target = $region80
      $region79: #{tpu_custom_call.1} parent=75 // pred_region
        %s1296 = smul.u32 2, %s30
        %p1297 = scmp.lt.s32.totalorder %s29, 1
        %s1298 = scalar_select %p1297, %s29, 1
        %p1299 = scmp.lt.s32.totalorder %s1296, 7
        %s1300 = scalar_select %p1299, %s1296, 7
        %s1301 = smul.addr %s1298, 8
        %s1302 = sadd.s32 %s1300, %s1301
        %s1303 = smul.addr %s1302, 8
        %s1304 = scalar_lea.vmem %s12, %s1303
      $region80: #{tpu_custom_call.1} parent=75 // pred_fallthru
        _
    $region76: #{tpu_custom_call.1} parent=5 // pred_fallthru
      _
  $region6: #{tpu_custom_call.1} parent=0 // loop_footer
    %s22 = sadd.s32 1, %s18
  $region7: #{tpu_custom_call.1} parent=0 // loop_footer_branch
    %17 = sbr.rel target = $region3
  $region8: #{tpu_custom_call.1} parent=0 // loop_exit
    _

</llo_original>
